<compile_context>
chip_gen: v7x
topology: tpu7x:2x2x1
jax: 0.10.0
libtpu: 0.0.40
codegen_flags: <defaults>
</compile_context>

<pallas_src>
import functools

import jax
import jax.numpy as jnp
from jax.experimental import pallas as pl
from jax.experimental.pallas import tpu as pltpu


def _dgnn_kernel(a1_ref, a2_ref, hw_ref, hhw_ref,
                 w1t_ref, b1_ref, w2t_ref, b2_ref,
                 w34t_ref, b34_ref, delta_ref,
                 out_ref, *, Bt, H, HID):
    """One batch block: fused linears + 3 softmax-weighted hist reductions."""
    f32 = jnp.float32

    def softmax_rows(x):
        m = jnp.max(x, axis=-1, keepdims=True)
        e = jnp.exp(x - m)
        s = jnp.sum(e, axis=-1, keepdims=True)
        inv = pl.reciprocal(s, approx=True)
        inv = inv * (2.0 - s * inv)          # one Newton step -> near-f32 accuracy
        return e * inv

    delta = delta_ref[...]                                   # (1, H)

    soft1 = softmax_rows(delta * hw_ref[...])                # (Bt, H)
    hhw = hhw_ref[...].reshape(H * Bt, H)                    # row = h1*Bt + b
    soft2 = softmax_rows(delta * hhw)                        # (H*Bt, H)

    # ---- fused input matmuls (2 MXU dots instead of 4) ----------------------
    a1 = a1_ref[...].reshape((1 + H) * Bt, -1)               # [self(Bt) ; one(h1*Bt+b)]
    a2 = a2_ref[...].reshape((H + H * H) * Bt, -1)           # [one ; two(h2*H*Bt+h1*Bt+b)]
    r1 = jnp.dot(a1, w1t_ref[...], preferred_element_type=f32) + b1_ref[...]
    r2 = jnp.dot(a2, w2t_ref[...], preferred_element_type=f32) + b2_ref[...]

    x_s = r1[:Bt, :]                                         # (Bt, HID)
    x_one_s = r1[Bt:, :]                                     # (H*Bt, HID)  row = h1*Bt+b
    x_n_one = r2[:H * Bt, :]                                 # (H*Bt, HID)  row = h1*Bt+b
    x_n_two = r2[H * Bt:, :]                                 # (H*H*Bt, HID) row = h2*H*Bt+h1*Bt+b

    # ---- level-1 aggregation into self node (unrolled, contiguous slabs) ----
    agg1 = jnp.zeros((Bt, HID), f32)
    for h in range(H):
        agg1 = agg1 + soft1[:, h:h + 1] * x_n_one[h * Bt:(h + 1) * Bt, :]
    x_s_one = jnp.maximum(x_s + agg1, 0.0)                   # relu

    # ---- level-2 aggregation into each 1-hop node ----------------------------
    agg2 = jnp.zeros((H * Bt, HID), f32)
    for h2 in range(H):
        agg2 = agg2 + soft2[:, h2:h2 + 1] * x_n_two[h2 * H * Bt:(h2 + 1) * H * Bt, :]
    x_one_s = jnp.maximum(x_one_s + agg2, 0.0)               # relu, (H*Bt, HID)

    # ---- second level-1 aggregation ------------------------------------------
    agg3 = jnp.zeros((Bt, HID), f32)
    for h in range(H):
        agg3 = agg3 + soft1[:, h:h + 1] * x_one_s[h * Bt:(h + 1) * Bt, :]

    # ---- fused output head (single MXU dot, lane-dense padded store) ---------
    xcat = jnp.concatenate([x_s_one, agg3], axis=-1)         # (Bt, 2*HID)
    out_ref[...] = (jnp.dot(xcat, w34t_ref[...], preferred_element_type=f32)
                    + b34_ref[...])


def dgnn_forward(params, self_feat, one_hop_feat, two_hop_feat,
                 his_weight, his_his_weight, *, hist_len, block_batch=64):
    f32 = jnp.float32
    B, feat_dim = self_feat.shape
    H = hist_len
    hid = params["w1"].shape[0]
    out_dim = params["w3"].shape[0]
    out_pad = pl.cdiv(out_dim, 128) * 128                    # lane-dense output slab

    # ---- wrapper-side layout plumbing (XLA, outside kernel) ------------------
    self_f = self_feat.astype(f32)
    one_r = one_hop_feat.reshape(B, H, feat_dim).transpose(1, 0, 2).astype(f32)
    two_r = (two_hop_feat.reshape(B, H, H, feat_dim)
             .transpose(2, 1, 0, 3).reshape(H * H, B, feat_dim).astype(f32))

    a1 = jnp.concatenate([self_f[None], one_r], axis=0)      # (1+H,   B, F)
    a2 = jnp.concatenate([one_r, two_r], axis=0)             # (H+H*H, B, F)

    hw = his_weight.reshape(B, H).astype(f32)                # (B, H)
    hhw = his_his_weight.reshape(B, H, H).transpose(1, 0, 2).astype(f32)  # (H1, B, H2)

    w1t = params["w1"].T.astype(f32)                         # (F, hid)
    b1 = params["b1"].reshape(1, hid).astype(f32)
    w2t = params["w2"].T.astype(f32)
    b2 = params["b2"].reshape(1, hid).astype(f32)
    w34t = jnp.concatenate([params["w3"].T, params["w4"].T], axis=0).astype(f32)
    w34t = jnp.pad(w34t, ((0, 0), (0, out_pad - out_dim)))   # (2*hid, out_pad), zero pad
    b34 = jnp.pad((params["b3"] + params["b4"]).reshape(1, out_dim).astype(f32),
                  ((0, 0), (0, out_pad - out_dim)))          # (1, out_pad)
    delta = params["delta"].reshape(1, H).astype(f32)

    # ---- batch tile size (sublane-aligned; halve block_batch for v7x) --------
    if B % 8 == 0:
        bt = max(8, (min(block_batch, B) // 8) * 8)
        while B % bt:
            bt -= 8
    else:
        bt = B                                               # full-dim fallback
    nb = B // bt

    kernel = functools.partial(_dgnn_kernel, Bt=bt, H=H, HID=hid)

    grid_spec = pltpu.PrefetchScalarGridSpec(
        num_scalar_prefetch=0,
        grid=(nb,),
        in_specs=[
            pl.BlockSpec((1 + H, bt, feat_dim), lambda i: (0, i, 0)),   # a1
            pl.BlockSpec((H + H * H, bt, feat_dim), lambda i: (0, i, 0)),  # a2
            pl.BlockSpec((bt, H), lambda i: (i, 0)),                    # hw
            pl.BlockSpec((H, bt, H), lambda i: (0, i, 0)),              # hhw
            pl.BlockSpec((feat_dim, hid), lambda i: (0, 0)),            # w1t
            pl.BlockSpec((1, hid), lambda i: (0, 0)),                   # b1
            pl.BlockSpec((feat_dim, hid), lambda i: (0, 0)),            # w2t
            pl.BlockSpec((1, hid), lambda i: (0, 0)),                   # b2
            pl.BlockSpec((2 * hid, out_pad), lambda i: (0, 0)),         # w34t
            pl.BlockSpec((1, out_pad), lambda i: (0, 0)),               # b34
            pl.BlockSpec((1, H), lambda i: (0, 0)),                     # delta
        ],
        out_specs=pl.BlockSpec((bt, out_pad), lambda i: (i, 0)),
    )

    out_padded = pl.pallas_call(
        kernel,
        out_shape=jax.ShapeDtypeStruct((B, out_pad), f32),
        grid_spec=grid_spec,
        compiler_params=pltpu.CompilerParams(
            dimension_semantics=("parallel",),
            vmem_limit_bytes=32 * 1024 * 1024),
    )(a1, a2, hw, hhw, w1t, b1, w2t, b2, w34t, b34, delta)

    return out_padded[:, :out_dim]


def dgnn_reference(params, self_feat, one_hop_feat, two_hop_feat,
                   his_weight, his_his_weight, *, hist_len):
    """Pure-JAX mirror of the PyTorch forward (for correctness checking)."""
    def linear(x, w, b):
        return x @ w.T + b

    H = hist_len
    hid = params["w1"].shape[0]
    delta = params["delta"]

    x_s = linear(self_feat, params["w1"], params["b1"])
    x_n_one = linear(one_hop_feat, params["w2"], params["b2"])
    soft = jax.nn.softmax(delta * his_weight, axis=1).reshape(-1, H, 1)
    x_n_one = jnp.sum(soft * x_n_one.reshape(-1, H, hid), axis=1)
    x_s_one = jax.nn.relu(x_s + x_n_one)

    x_one_s = linear(one_hop_feat, params["w1"], params["b1"])
    x_n_two = linear(two_hop_feat, params["w2"], params["b2"])
    soft2 = jax.nn.softmax(delta * his_his_weight, axis=2).reshape(-1, H, H, 1)
    x_n_two = jnp.sum(soft2 * x_n_two.reshape(-1, H, H, hid), axis=2)
    x_one_s = jax.nn.relu(x_one_s.reshape(-1, H, hid) + x_n_two)

    x_s_one_final = linear(x_s_one, params["w3"], params["b3"])
    x_n_one_final = jnp.sum(soft * x_one_s, axis=1)
    x_n_one_final = linear(x_n_one_final, params["w4"], params["b4"])
    return x_s_one_final + x_n_one_final


if __name__ == "__main__":
    # args: feat_dim=16, hid_dim=32, out_dim=8, hist_len=8, batch B=16 (tiled by 8)
    B, FEAT, HID, OUT, H = 16, 16, 32, 8, 8

    key = jax.random.PRNGKey(0)
    ks = jax.random.split(key, 10)

    def kaiming(k, shape):
        fan_in = shape[1]
        return (jnp.sqrt(2.0 / fan_in) * jax.random.normal(k, shape)).astype(jnp.float32)

    params = {
        "w1": kaiming(ks[0], (HID, FEAT)), "b1": jnp.zeros((HID,), jnp.float32),
        "w2": kaiming(ks[1], (HID, FEAT)), "b2": jnp.zeros((HID,), jnp.float32),
        "w3": kaiming(ks[2], (OUT, HID)),  "b3": jnp.zeros((OUT,), jnp.float32),
        "w4": kaiming(ks[3], (OUT, HID)),  "b4": jnp.zeros((OUT,), jnp.float32),
        "delta": jnp.ones((H,), jnp.float32),
    }

    self_feat = jax.random.normal(ks[4], (B, FEAT), jnp.float32)
    one_hop_feat = jax.random.normal(ks[5], (B * H, FEAT), jnp.float32)
    two_hop_feat = jax.random.normal(ks[6], (B * H * H, FEAT), jnp.float32)
    his_weight = jax.random.normal(ks[7], (B, H), jnp.float32)
    his_his_weight = jax.random.normal(ks[8], (B, H, H), jnp.float32)

    out = dgnn_forward(params, self_feat, one_hop_feat, two_hop_feat,
                       his_weight, his_his_weight, hist_len=H, block_batch=8)
    out = jax.block_until_ready(out)

    ref = dgnn_reference(params, self_feat, one_hop_feat, two_hop_feat,
                         his_weight, his_his_weight, hist_len=H)

    assert out.shape == (B, OUT), out.shape
    assert jnp.allclose(out, ref, atol=1e-3, rtol=1e-3), \
        f"max abs err {jnp.max(jnp.abs(out - ref))}"
    print("KERNEL_OK")
</pallas_src>

<mosaic_0001>
module attributes {stable_mosaic.version = 11 : i64} {
  func.func @_dgnn_kernel(%arg0: i32, %arg1: memref<9x8x16xf32, #tpu.memory_space<vmem>>, %arg2: memref<72x8x16xf32, #tpu.memory_space<vmem>>, %arg3: memref<8x8xf32, #tpu.memory_space<vmem>>, %arg4: memref<8x8x8xf32, #tpu.memory_space<vmem>>, %arg5: memref<16x32xf32, #tpu.memory_space<vmem>>, %arg6: memref<1x32xf32, #tpu.memory_space<vmem>>, %arg7: memref<16x32xf32, #tpu.memory_space<vmem>>, %arg8: memref<1x32xf32, #tpu.memory_space<vmem>>, %arg9: memref<64x128xf32, #tpu.memory_space<vmem>>, %arg10: memref<1x128xf32, #tpu.memory_space<vmem>>, %arg11: memref<1x8xf32, #tpu.memory_space<vmem>>, %arg12: memref<8x128xf32, #tpu.memory_space<vmem>>) attributes {dimension_semantics = [#tpu.dimension_semantics<parallel>], iteration_bounds = array<i64: 2>, scalar_prefetch = 0 : i64, scratch_operands = 0 : i64, tpu.core_type = #tpu.core_type<tc>, window_params = [{transform_indices = @transform_0, window_bounds = array<i64: 9, 8, 16>}, {transform_indices = @transform_1, window_bounds = array<i64: 72, 8, 16>}, {transform_indices = @transform_2, window_bounds = array<i64: 8, 8>}, {transform_indices = @transform_3, window_bounds = array<i64: 8, 8, 8>}, {pipeline_mode = #tpu.pipeline_mode<synchronous>, transform_indices = @transform_4, window_bounds = array<i64: 16, 32>}, {pipeline_mode = #tpu.pipeline_mode<synchronous>, transform_indices = @transform_5, window_bounds = array<i64: 1, 32>}, {pipeline_mode = #tpu.pipeline_mode<synchronous>, transform_indices = @transform_6, window_bounds = array<i64: 16, 32>}, {pipeline_mode = #tpu.pipeline_mode<synchronous>, transform_indices = @transform_7, window_bounds = array<i64: 1, 32>}, {pipeline_mode = #tpu.pipeline_mode<synchronous>, transform_indices = @transform_8, window_bounds = array<i64: 64, 128>}, {pipeline_mode = #tpu.pipeline_mode<synchronous>, transform_indices = @transform_9, window_bounds = array<i64: 1, 128>}, {pipeline_mode = #tpu.pipeline_mode<synchronous>, transform_indices = @transform_10, window_bounds = array<i64: 1, 8>}, {transform_indices = @transform_11, window_bounds = array<i64: 8, 128>}]} {
    %c0 = arith.constant 0 : index
    %c0_0 = arith.constant 0 : index
    %0 = vector.load %arg11[%c0, %c0_0] : memref<1x8xf32, #tpu.memory_space<vmem>>, vector<1x8xf32>
    %c0_1 = arith.constant 0 : index
    %c0_2 = arith.constant 0 : index
    %1 = vector.load %arg3[%c0_1, %c0_2] : memref<8x8xf32, #tpu.memory_space<vmem>>, vector<8x8xf32>
    %2 = vector.broadcast %0 : vector<1x8xf32> to vector<8x8xf32>
    %3 = arith.mulf %2, %1 : vector<8x8xf32>
    %cst = arith.constant dense<0xFF800000> : vector<8xf32>
    %4 = vector.multi_reduction <maximumf>, %3, %cst [1] : vector<8x8xf32> to vector<8xf32>
    %5 = vector.shape_cast %4 : vector<8xf32> to vector<8x1xf32>
    %6 = vector.broadcast %5 : vector<8x1xf32> to vector<8x8xf32>
    %7 = arith.subf %3, %6 : vector<8x8xf32>
    %8 = math.exp %7 : vector<8x8xf32>
    %cst_3 = arith.constant dense<0.000000e+00> : vector<8xf32>
    %9 = vector.multi_reduction <add>, %8, %cst_3 [1] : vector<8x8xf32> to vector<8xf32>
    %10 = vector.shape_cast %9 : vector<8xf32> to vector<8x1xf32>
    %11 = tpu.reciprocal %10 {approx = true} : vector<8x1xf32> -> vector<8x1xf32>
    %12 = arith.mulf %10, %11 : vector<8x1xf32>
    %cst_4 = arith.constant 2.000000e+00 : f32
    %13 = vector.broadcast %cst_4 : f32 to vector<8x1xf32>
    %14 = arith.subf %13, %12 : vector<8x1xf32>
    %15 = arith.mulf %11, %14 : vector<8x1xf32>
    %16 = vector.broadcast %15 : vector<8x1xf32> to vector<8x8xf32>
    %17 = arith.mulf %8, %16 : vector<8x8xf32>
    %c0_5 = arith.constant 0 : index
    %c0_6 = arith.constant 0 : index
    %c0_7 = arith.constant 0 : index
    %18 = vector.load %arg4[%c0_5, %c0_6, %c0_7] : memref<8x8x8xf32, #tpu.memory_space<vmem>>, vector<8x8x8xf32>
    %19 = vector.shape_cast %18 : vector<8x8x8xf32> to vector<64x8xf32>
    %20 = vector.broadcast %0 : vector<1x8xf32> to vector<64x8xf32>
    %21 = arith.mulf %20, %19 : vector<64x8xf32>
    %cst_8 = arith.constant dense<0xFF800000> : vector<64xf32>
    %22 = vector.multi_reduction <maximumf>, %21, %cst_8 [1] : vector<64x8xf32> to vector<64xf32>
    %23 = vector.shape_cast %22 : vector<64xf32> to vector<64x1xf32>
    %24 = vector.broadcast %23 : vector<64x1xf32> to vector<64x8xf32>
    %25 = arith.subf %21, %24 : vector<64x8xf32>
    %26 = math.exp %25 : vector<64x8xf32>
    %cst_9 = arith.constant dense<0.000000e+00> : vector<64xf32>
    %27 = vector.multi_reduction <add>, %26, %cst_9 [1] : vector<64x8xf32> to vector<64xf32>
    %28 = vector.shape_cast %27 : vector<64xf32> to vector<64x1xf32>
    %29 = tpu.reciprocal %28 {approx = true} : vector<64x1xf32> -> vector<64x1xf32>
    %30 = arith.mulf %28, %29 : vector<64x1xf32>
    %cst_10 = arith.constant 2.000000e+00 : f32
    %31 = vector.broadcast %cst_10 : f32 to vector<64x1xf32>
    %32 = arith.subf %31, %30 : vector<64x1xf32>
    %33 = arith.mulf %29, %32 : vector<64x1xf32>
    %34 = vector.broadcast %33 : vector<64x1xf32> to vector<64x8xf32>
    %35 = arith.mulf %26, %34 : vector<64x8xf32>
    %c0_11 = arith.constant 0 : index
    %c0_12 = arith.constant 0 : index
    %c0_13 = arith.constant 0 : index
    %36 = vector.load %arg1[%c0_11, %c0_12, %c0_13] : memref<9x8x16xf32, #tpu.memory_space<vmem>>, vector<9x8x16xf32>
    %37 = vector.shape_cast %36 : vector<9x8x16xf32> to vector<72x16xf32>
    %c0_14 = arith.constant 0 : index
    %c0_15 = arith.constant 0 : index
    %c0_16 = arith.constant 0 : index
    %38 = vector.load %arg2[%c0_14, %c0_15, %c0_16] : memref<72x8x16xf32, #tpu.memory_space<vmem>>, vector<72x8x16xf32>
    %39 = vector.shape_cast %38 : vector<72x8x16xf32> to vector<576x16xf32>
    %c0_17 = arith.constant 0 : index
    %c0_18 = arith.constant 0 : index
    %40 = vector.load %arg5[%c0_17, %c0_18] : memref<16x32xf32, #tpu.memory_space<vmem>>, vector<16x32xf32>
    %cst_19 = arith.constant dense<0.000000e+00> : vector<72x32xf32>
    %41 = tpu.matmul %37, %40, %cst_19 {dimension_numbers = #tpu.dot_dimension_numbers<[1], [0], [0], [1], [0, 0, 1, 1], [], []>} : vector<72x16xf32>, vector<16x32xf32>, vector<72x32xf32> -> vector<72x32xf32>
    %c0_20 = arith.constant 0 : index
    %c0_21 = arith.constant 0 : index
    %42 = vector.load %arg6[%c0_20, %c0_21] : memref<1x32xf32, #tpu.memory_space<vmem>>, vector<1x32xf32>
    %43 = vector.broadcast %42 : vector<1x32xf32> to vector<72x32xf32>
    %44 = arith.addf %41, %43 : vector<72x32xf32>
    %c0_22 = arith.constant 0 : index
    %c0_23 = arith.constant 0 : index
    %45 = vector.load %arg7[%c0_22, %c0_23] : memref<16x32xf32, #tpu.memory_space<vmem>>, vector<16x32xf32>
    %cst_24 = arith.constant dense<0.000000e+00> : vector<576x32xf32>
    %46 = tpu.matmul %39, %45, %cst_24 {dimension_numbers = #tpu.dot_dimension_numbers<[1], [0], [0], [1], [0, 0, 1, 1], [], []>} : vector<576x16xf32>, vector<16x32xf32>, vector<576x32xf32> -> vector<576x32xf32>
    %c0_25 = arith.constant 0 : index
    %c0_26 = arith.constant 0 : index
    %47 = vector.load %arg8[%c0_25, %c0_26] : memref<1x32xf32, #tpu.memory_space<vmem>>, vector<1x32xf32>
    %48 = vector.broadcast %47 : vector<1x32xf32> to vector<576x32xf32>
    %49 = arith.addf %46, %48 : vector<576x32xf32>
    %50 = vector.extract_strided_slice %44 {offsets = [0, 0], sizes = [8, 32], strides = [1, 1]} : vector<72x32xf32> to vector<8x32xf32>
    %51 = vector.extract_strided_slice %44 {offsets = [8, 0], sizes = [64, 32], strides = [1, 1]} : vector<72x32xf32> to vector<64x32xf32>
    %52 = vector.extract_strided_slice %49 {offsets = [0, 0], sizes = [64, 32], strides = [1, 1]} : vector<576x32xf32> to vector<64x32xf32>
    %53 = vector.extract_strided_slice %49 {offsets = [64, 0], sizes = [512, 32], strides = [1, 1]} : vector<576x32xf32> to vector<512x32xf32>
    %cst_27 = arith.constant 0.000000e+00 : f32
    %54 = vector.broadcast %cst_27 : f32 to vector<8x32xf32>
    %55 = vector.extract_strided_slice %17 {offsets = [0, 0], sizes = [8, 1], strides = [1, 1]} : vector<8x8xf32> to vector<8x1xf32>
    %56 = vector.extract_strided_slice %52 {offsets = [0, 0], sizes = [8, 32], strides = [1, 1]} : vector<64x32xf32> to vector<8x32xf32>
    %57 = vector.broadcast %55 : vector<8x1xf32> to vector<8x32xf32>
    %58 = arith.mulf %57, %56 : vector<8x32xf32>
    %59 = arith.addf %54, %58 : vector<8x32xf32>
    %60 = vector.extract_strided_slice %17 {offsets = [0, 1], sizes = [8, 1], strides = [1, 1]} : vector<8x8xf32> to vector<8x1xf32>
    %61 = vector.extract_strided_slice %52 {offsets = [8, 0], sizes = [8, 32], strides = [1, 1]} : vector<64x32xf32> to vector<8x32xf32>
    %62 = vector.broadcast %60 : vector<8x1xf32> to vector<8x32xf32>
    %63 = arith.mulf %62, %61 : vector<8x32xf32>
    %64 = arith.addf %59, %63 : vector<8x32xf32>
    %65 = vector.extract_strided_slice %17 {offsets = [0, 2], sizes = [8, 1], strides = [1, 1]} : vector<8x8xf32> to vector<8x1xf32>
    %66 = vector.extract_strided_slice %52 {offsets = [16, 0], sizes = [8, 32], strides = [1, 1]} : vector<64x32xf32> to vector<8x32xf32>
    %67 = vector.broadcast %65 : vector<8x1xf32> to vector<8x32xf32>
    %68 = arith.mulf %67, %66 : vector<8x32xf32>
    %69 = arith.addf %64, %68 : vector<8x32xf32>
    %70 = vector.extract_strided_slice %17 {offsets = [0, 3], sizes = [8, 1], strides = [1, 1]} : vector<8x8xf32> to vector<8x1xf32>
    %71 = vector.extract_strided_slice %52 {offsets = [24, 0], sizes = [8, 32], strides = [1, 1]} : vector<64x32xf32> to vector<8x32xf32>
    %72 = vector.broadcast %70 : vector<8x1xf32> to vector<8x32xf32>
    %73 = arith.mulf %72, %71 : vector<8x32xf32>
    %74 = arith.addf %69, %73 : vector<8x32xf32>
    %75 = vector.extract_strided_slice %17 {offsets = [0, 4], sizes = [8, 1], strides = [1, 1]} : vector<8x8xf32> to vector<8x1xf32>
    %76 = vector.extract_strided_slice %52 {offsets = [32, 0], sizes = [8, 32], strides = [1, 1]} : vector<64x32xf32> to vector<8x32xf32>
    %77 = vector.broadcast %75 : vector<8x1xf32> to vector<8x32xf32>
    %78 = arith.mulf %77, %76 : vector<8x32xf32>
    %79 = arith.addf %74, %78 : vector<8x32xf32>
    %80 = vector.extract_strided_slice %17 {offsets = [0, 5], sizes = [8, 1], strides = [1, 1]} : vector<8x8xf32> to vector<8x1xf32>
    %81 = vector.extract_strided_slice %52 {offsets = [40, 0], sizes = [8, 32], strides = [1, 1]} : vector<64x32xf32> to vector<8x32xf32>
    %82 = vector.broadcast %80 : vector<8x1xf32> to vector<8x32xf32>
    %83 = arith.mulf %82, %81 : vector<8x32xf32>
    %84 = arith.addf %79, %83 : vector<8x32xf32>
    %85 = vector.extract_strided_slice %17 {offsets = [0, 6], sizes = [8, 1], strides = [1, 1]} : vector<8x8xf32> to vector<8x1xf32>
    %86 = vector.extract_strided_slice %52 {offsets = [48, 0], sizes = [8, 32], strides = [1, 1]} : vector<64x32xf32> to vector<8x32xf32>
    %87 = vector.broadcast %85 : vector<8x1xf32> to vector<8x32xf32>
    %88 = arith.mulf %87, %86 : vector<8x32xf32>
    %89 = arith.addf %84, %88 : vector<8x32xf32>
    %90 = vector.extract_strided_slice %17 {offsets = [0, 7], sizes = [8, 1], strides = [1, 1]} : vector<8x8xf32> to vector<8x1xf32>
    %91 = vector.extract_strided_slice %52 {offsets = [56, 0], sizes = [8, 32], strides = [1, 1]} : vector<64x32xf32> to vector<8x32xf32>
    %92 = vector.broadcast %90 : vector<8x1xf32> to vector<8x32xf32>
    %93 = arith.mulf %92, %91 : vector<8x32xf32>
    %94 = arith.addf %89, %93 : vector<8x32xf32>
    %95 = arith.addf %50, %94 : vector<8x32xf32>
    %cst_28 = arith.constant 0.000000e+00 : f32
    %96 = vector.broadcast %cst_28 : f32 to vector<8x32xf32>
    %97 = arith.maximumf %95, %96 : vector<8x32xf32>
    %cst_29 = arith.constant 0.000000e+00 : f32
    %98 = vector.broadcast %cst_29 : f32 to vector<64x32xf32>
    %99 = vector.extract_strided_slice %35 {offsets = [0, 0], sizes = [64, 1], strides = [1, 1]} : vector<64x8xf32> to vector<64x1xf32>
    %100 = vector.extract_strided_slice %53 {offsets = [0, 0], sizes = [64, 32], strides = [1, 1]} : vector<512x32xf32> to vector<64x32xf32>
    %101 = vector.broadcast %99 : vector<64x1xf32> to vector<64x32xf32>
    %102 = arith.mulf %101, %100 : vector<64x32xf32>
    %103 = arith.addf %98, %102 : vector<64x32xf32>
    %104 = vector.extract_strided_slice %35 {offsets = [0, 1], sizes = [64, 1], strides = [1, 1]} : vector<64x8xf32> to vector<64x1xf32>
    %105 = vector.extract_strided_slice %53 {offsets = [64, 0], sizes = [64, 32], strides = [1, 1]} : vector<512x32xf32> to vector<64x32xf32>
    %106 = vector.broadcast %104 : vector<64x1xf32> to vector<64x32xf32>
    %107 = arith.mulf %106, %105 : vector<64x32xf32>
    %108 = arith.addf %103, %107 : vector<64x32xf32>
    %109 = vector.extract_strided_slice %35 {offsets = [0, 2], sizes = [64, 1], strides = [1, 1]} : vector<64x8xf32> to vector<64x1xf32>
    %110 = vector.extract_strided_slice %53 {offsets = [128, 0], sizes = [64, 32], strides = [1, 1]} : vector<512x32xf32> to vector<64x32xf32>
    %111 = vector.broadcast %109 : vector<64x1xf32> to vector<64x32xf32>
    %112 = arith.mulf %111, %110 : vector<64x32xf32>
    %113 = arith.addf %108, %112 : vector<64x32xf32>
    %114 = vector.extract_strided_slice %35 {offsets = [0, 3], sizes = [64, 1], strides = [1, 1]} : vector<64x8xf32> to vector<64x1xf32>
    %115 = vector.extract_strided_slice %53 {offsets = [192, 0], sizes = [64, 32], strides = [1, 1]} : vector<512x32xf32> to vector<64x32xf32>
    %116 = vector.broadcast %114 : vector<64x1xf32> to vector<64x32xf32>
    %117 = arith.mulf %116, %115 : vector<64x32xf32>
    %118 = arith.addf %113, %117 : vector<64x32xf32>
    %119 = vector.extract_strided_slice %35 {offsets = [0, 4], sizes = [64, 1], strides = [1, 1]} : vector<64x8xf32> to vector<64x1xf32>
    %120 = vector.extract_strided_slice %53 {offsets = [256, 0], sizes = [64, 32], strides = [1, 1]} : vector<512x32xf32> to vector<64x32xf32>
    %121 = vector.broadcast %119 : vector<64x1xf32> to vector<64x32xf32>
    %122 = arith.mulf %121, %120 : vector<64x32xf32>
    %123 = arith.addf %118, %122 : vector<64x32xf32>
    %124 = vector.extract_strided_slice %35 {offsets = [0, 5], sizes = [64, 1], strides = [1, 1]} : vector<64x8xf32> to vector<64x1xf32>
    %125 = vector.extract_strided_slice %53 {offsets = [320, 0], sizes = [64, 32], strides = [1, 1]} : vector<512x32xf32> to vector<64x32xf32>
    %126 = vector.broadcast %124 : vector<64x1xf32> to vector<64x32xf32>
    %127 = arith.mulf %126, %125 : vector<64x32xf32>
    %128 = arith.addf %123, %127 : vector<64x32xf32>
    %129 = vector.extract_strided_slice %35 {offsets = [0, 6], sizes = [64, 1], strides = [1, 1]} : vector<64x8xf32> to vector<64x1xf32>
    %130 = vector.extract_strided_slice %53 {offsets = [384, 0], sizes = [64, 32], strides = [1, 1]} : vector<512x32xf32> to vector<64x32xf32>
    %131 = vector.broadcast %129 : vector<64x1xf32> to vector<64x32xf32>
    %132 = arith.mulf %131, %130 : vector<64x32xf32>
    %133 = arith.addf %128, %132 : vector<64x32xf32>
    %134 = vector.extract_strided_slice %35 {offsets = [0, 7], sizes = [64, 1], strides = [1, 1]} : vector<64x8xf32> to vector<64x1xf32>
    %135 = vector.extract_strided_slice %53 {offsets = [448, 0], sizes = [64, 32], strides = [1, 1]} : vector<512x32xf32> to vector<64x32xf32>
    %136 = vector.broadcast %134 : vector<64x1xf32> to vector<64x32xf32>
    %137 = arith.mulf %136, %135 : vector<64x32xf32>
    %138 = arith.addf %133, %137 : vector<64x32xf32>
    %139 = arith.addf %51, %138 : vector<64x32xf32>
    %cst_30 = arith.constant 0.000000e+00 : f32
    %140 = vector.broadcast %cst_30 : f32 to vector<64x32xf32>
    %141 = arith.maximumf %139, %140 : vector<64x32xf32>
    %cst_31 = arith.constant 0.000000e+00 : f32
    %142 = vector.broadcast %cst_31 : f32 to vector<8x32xf32>
    %143 = vector.extract_strided_slice %17 {offsets = [0, 0], sizes = [8, 1], strides = [1, 1]} : vector<8x8xf32> to vector<8x1xf32>
    %144 = vector.extract_strided_slice %141 {offsets = [0, 0], sizes = [8, 32], strides = [1, 1]} : vector<64x32xf32> to vector<8x32xf32>
    %145 = vector.broadcast %143 : vector<8x1xf32> to vector<8x32xf32>
    %146 = arith.mulf %145, %144 : vector<8x32xf32>
    %147 = arith.addf %142, %146 : vector<8x32xf32>
    %148 = vector.extract_strided_slice %17 {offsets = [0, 1], sizes = [8, 1], strides = [1, 1]} : vector<8x8xf32> to vector<8x1xf32>
    %149 = vector.extract_strided_slice %141 {offsets = [8, 0], sizes = [8, 32], strides = [1, 1]} : vector<64x32xf32> to vector<8x32xf32>
    %150 = vector.broadcast %148 : vector<8x1xf32> to vector<8x32xf32>
    %151 = arith.mulf %150, %149 : vector<8x32xf32>
    %152 = arith.addf %147, %151 : vector<8x32xf32>
    %153 = vector.extract_strided_slice %17 {offsets = [0, 2], sizes = [8, 1], strides = [1, 1]} : vector<8x8xf32> to vector<8x1xf32>
    %154 = vector.extract_strided_slice %141 {offsets = [16, 0], sizes = [8, 32], strides = [1, 1]} : vector<64x32xf32> to vector<8x32xf32>
    %155 = vector.broadcast %153 : vector<8x1xf32> to vector<8x32xf32>
    %156 = arith.mulf %155, %154 : vector<8x32xf32>
    %157 = arith.addf %152, %156 : vector<8x32xf32>
    %158 = vector.extract_strided_slice %17 {offsets = [0, 3], sizes = [8, 1], strides = [1, 1]} : vector<8x8xf32> to vector<8x1xf32>
    %159 = vector.extract_strided_slice %141 {offsets = [24, 0], sizes = [8, 32], strides = [1, 1]} : vector<64x32xf32> to vector<8x32xf32>
    %160 = vector.broadcast %158 : vector<8x1xf32> to vector<8x32xf32>
    %161 = arith.mulf %160, %159 : vector<8x32xf32>
    %162 = arith.addf %157, %161 : vector<8x32xf32>
    %163 = vector.extract_strided_slice %17 {offsets = [0, 4], sizes = [8, 1], strides = [1, 1]} : vector<8x8xf32> to vector<8x1xf32>
    %164 = vector.extract_strided_slice %141 {offsets = [32, 0], sizes = [8, 32], strides = [1, 1]} : vector<64x32xf32> to vector<8x32xf32>
    %165 = vector.broadcast %163 : vector<8x1xf32> to vector<8x32xf32>
    %166 = arith.mulf %165, %164 : vector<8x32xf32>
    %167 = arith.addf %162, %166 : vector<8x32xf32>
    %168 = vector.extract_strided_slice %17 {offsets = [0, 5], sizes = [8, 1], strides = [1, 1]} : vector<8x8xf32> to vector<8x1xf32>
    %169 = vector.extract_strided_slice %141 {offsets = [40, 0], sizes = [8, 32], strides = [1, 1]} : vector<64x32xf32> to vector<8x32xf32>
    %170 = vector.broadcast %168 : vector<8x1xf32> to vector<8x32xf32>
    %171 = arith.mulf %170, %169 : vector<8x32xf32>
    %172 = arith.addf %167, %171 : vector<8x32xf32>
    %173 = vector.extract_strided_slice %17 {offsets = [0, 6], sizes = [8, 1], strides = [1, 1]} : vector<8x8xf32> to vector<8x1xf32>
    %174 = vector.extract_strided_slice %141 {offsets = [48, 0], sizes = [8, 32], strides = [1, 1]} : vector<64x32xf32> to vector<8x32xf32>
    %175 = vector.broadcast %173 : vector<8x1xf32> to vector<8x32xf32>
    %176 = arith.mulf %175, %174 : vector<8x32xf32>
    %177 = arith.addf %172, %176 : vector<8x32xf32>
    %178 = vector.extract_strided_slice %17 {offsets = [0, 7], sizes = [8, 1], strides = [1, 1]} : vector<8x8xf32> to vector<8x1xf32>
    %179 = vector.extract_strided_slice %141 {offsets = [56, 0], sizes = [8, 32], strides = [1, 1]} : vector<64x32xf32> to vector<8x32xf32>
    %180 = vector.broadcast %178 : vector<8x1xf32> to vector<8x32xf32>
    %181 = arith.mulf %180, %179 : vector<8x32xf32>
    %182 = arith.addf %177, %181 : vector<8x32xf32>
    %183 = tpu.concatenate %97, %182 in 1 : vector<8x32xf32>, vector<8x32xf32> -> vector<8x64xf32>
    %c0_32 = arith.constant 0 : index
    %c0_33 = arith.constant 0 : index
    %184 = vector.load %arg9[%c0_32, %c0_33] : memref<64x128xf32, #tpu.memory_space<vmem>>, vector<64x128xf32>
    %cst_34 = arith.constant dense<0.000000e+00> : vector<8x128xf32>
    %185 = tpu.matmul %183, %184, %cst_34 {dimension_numbers = #tpu.dot_dimension_numbers<[1], [0], [0], [1], [0, 0, 1, 1], [], []>} : vector<8x64xf32>, vector<64x128xf32>, vector<8x128xf32> -> vector<8x128xf32>
    %c0_35 = arith.constant 0 : index
    %c0_36 = arith.constant 0 : index
    %186 = vector.load %arg10[%c0_35, %c0_36] : memref<1x128xf32, #tpu.memory_space<vmem>>, vector<1x128xf32>
    %187 = vector.broadcast %186 : vector<1x128xf32> to vector<8x128xf32>
    %188 = arith.addf %185, %187 : vector<8x128xf32>
    %c0_37 = arith.constant 0 : index
    %c0_38 = arith.constant 0 : index
    %189 = vector.load %arg12[%c0_37, %c0_38] : memref<8x128xf32, #tpu.memory_space<vmem>>, vector<8x128xf32>
    tpu.vector_store %arg12[%c0_37, %c0_38], %188 {strides = array<i32>} : memref<8x128xf32, #tpu.memory_space<vmem>>, vector<8x128xf32>,
    return
  }
  func.func @transform_0(%arg0: i32) -> (i32, i32, i32) {
    %c0_i32 = arith.constant 0 : i32
    %c0_i32_0 = arith.constant 0 : i32
    %c0_i32_1 = arith.constant 0 : i32
    return %c0_i32, %arg0, %c0_i32_0 : i32, i32, i32
  }
  func.func @transform_1(%arg0: i32) -> (i32, i32, i32) {
    %c0_i32 = arith.constant 0 : i32
    %c0_i32_0 = arith.constant 0 : i32
    %c0_i32_1 = arith.constant 0 : i32
    return %c0_i32, %arg0, %c0_i32_0 : i32, i32, i32
  }
  func.func @transform_2(%arg0: i32) -> (i32, i32) {
    %c0_i32 = arith.constant 0 : i32
    %c0_i32_0 = arith.constant 0 : i32
    return %arg0, %c0_i32 : i32, i32
  }
  func.func @transform_3(%arg0: i32) -> (i32, i32, i32) {
    %c0_i32 = arith.constant 0 : i32
    %c0_i32_0 = arith.constant 0 : i32
    %c0_i32_1 = arith.constant 0 : i32
    return %c0_i32, %arg0, %c0_i32_0 : i32, i32, i32
  }
  func.func @transform_4(%arg0: i32) -> (i32, i32) {
    %c0_i32 = arith.constant 0 : i32
    %c0_i32_0 = arith.constant 0 : i32
    %c0_i32_1 = arith.constant 0 : i32
    return %c0_i32, %c0_i32_0 : i32, i32
  }
  func.func @transform_5(%arg0: i32) -> (i32, i32) {
    %c0_i32 = arith.constant 0 : i32
    %c0_i32_0 = arith.constant 0 : i32
    %c0_i32_1 = arith.constant 0 : i32
    return %c0_i32, %c0_i32_0 : i32, i32
  }
  func.func @transform_6(%arg0: i32) -> (i32, i32) {
    %c0_i32 = arith.constant 0 : i32
    %c0_i32_0 = arith.constant 0 : i32
    %c0_i32_1 = arith.constant 0 : i32
    return %c0_i32, %c0_i32_0 : i32, i32
  }
  func.func @transform_7(%arg0: i32) -> (i32, i32) {
    %c0_i32 = arith.constant 0 : i32
    %c0_i32_0 = arith.constant 0 : i32
    %c0_i32_1 = arith.constant 0 : i32
    return %c0_i32, %c0_i32_0 : i32, i32
  }
  func.func @transform_8(%arg0: i32) -> (i32, i32) {
    %c0_i32 = arith.constant 0 : i32
    %c0_i32_0 = arith.constant 0 : i32
    %c0_i32_1 = arith.constant 0 : i32
    return %c0_i32, %c0_i32_0 : i32, i32
  }
  func.func @transform_9(%arg0: i32) -> (i32, i32) {
    %c0_i32 = arith.constant 0 : i32
    %c0_i32_0 = arith.constant 0 : i32
    %c0_i32_1 = arith.constant 0 : i32
    return %c0_i32, %c0_i32_0 : i32, i32
  }
  func.func @transform_10(%arg0: i32) -> (i32, i32) {
    %c0_i32 = arith.constant 0 : i32
    %c0_i32_0 = arith.constant 0 : i32
    %c0_i32_1 = arith.constant 0 : i32
    return %c0_i32, %c0_i32_0 : i32, i32
  }
  func.func @transform_11(%arg0: i32) -> (i32, i32) {
    %c0_i32 = arith.constant 0 : i32
    %c0_i32_0 = arith.constant 0 : i32
    return %arg0, %c0_i32 : i32, i32
  }
}

</mosaic_0001>

<llo_original>
// kernel: tpu_custom_call.1
$region0: #{tpu_custom_call.1}
  #allocation0 [shape = 'u32[]', space=smem, size = 0x4, offset = 0x4, fixed_abs, tag = 'smem constant byte address 0x4 - core index']
  #allocation1 [shape = 'u32[144,128]{1,0:T(1,128)}', space=vmem, size = 0x12000, scoped, tag = 'internal scratch']
  %s0 = inlined_call_operand.vmem [shape: f32[9,16,16], index: 0, kind: input, shape index: {}]
  %s1 = inlined_call_operand.vmem [shape: f32[72,16,16], index: 1, kind: input, shape index: {}]
  %s2 = inlined_call_operand.vmem [shape: f32[16,8], index: 2, kind: input, shape index: {}]
  %s3 = inlined_call_operand.vmem [shape: f32[8,16,8], index: 3, kind: input, shape index: {}]
  %s4 = inlined_call_operand.vmem [shape: f32[16,32], index: 4, kind: input, shape index: {}]
  %s5 = inlined_call_operand.vmem [shape: f32[1,32], index: 5, kind: input, shape index: {}]
  %s6 = inlined_call_operand.vmem [shape: f32[16,32], index: 6, kind: input, shape index: {}]
  %s7 = inlined_call_operand.vmem [shape: f32[1,32], index: 7, kind: input, shape index: {}]
  %s8 = inlined_call_operand.vmem [shape: f32[64,128], index: 8, kind: input, shape index: {}]
  %s9 = inlined_call_operand.vmem [shape: f32[1,128], index: 9, kind: input, shape index: {}]
  %s10 = inlined_call_operand.vmem [shape: f32[1,8], index: 10, kind: input, shape index: {}]
  %s11 = inlined_call_operand.hbm [shape: f32[16,128], index: 11, kind: output, shape index: {}]
  %s12 = sld [smem:[#allocation0]]
  $region191: #{tpu_custom_call.1} parent=0
    _
  %s14 = ssub.s32 1, %s12
  %s15 = scalar_select 0, %s14, %s12
  $region1: #{tpu_custom_call.1} parent=0
    #allocation2 [shape = 'u8[73728]{0}', space=vmem, size = 0x12000, scoped, tag = 'input window, operand 0']
    #allocation3 [shape = 'u8[589824]{0}', space=vmem, size = 0x90000, scoped, tag = 'input window, operand 1']
    #allocation4 [shape = 'u8[65536]{0}', space=vmem, size = 0x10000, scoped, tag = 'input window, operand 3']
    #allocation5 [shape = 'u8[8192]{0}', space=vmem, size = 0x2000, scoped, tag = 'output window, operand 0']
    #allocation6 [shape = 's32[2]{0}', space=sflag, size = 0x8, scoped, tag = 'scoped memory for tpu_custom_call.1']
    %16 = vsyncpa [#allocation6], 0
    %s17 = scalar_lea.sflag [#allocation6], 1
    %18 = vsyncpa %s17, 0
    loop: start=0, step=1, limit=4
    $region2: #{tpu_custom_call.1} parent=1 // loop_pre_header
      _
    $region3: #{tpu_custom_call.1} parent=1 // loop_header
      %s20 = sphi 0, %s24
      %p21 = scmp.ge.s32.totalorder %s20, 4
      %s30 = sphi 0, %s32
      %s33 = sphi 0, %s30
      %s34 = sphi 0, %s33
      %s50 = sphi 0, %s34
      %s56 = sphi 0, %s58
      %s59 = sphi 0, %s56
      %s60 = sphi 0, %s59
      %s76 = sphi 0, %s60
      %s82 = sphi 0, %s84
      %s85 = sphi 0, %s82
      %s86 = sphi 0, %s85
      %s102 = sphi 0, %s86
      %s108 = sphi 0, %s110
      %s111 = sphi 0, %s108
      %s112 = sphi 0, %s111
      %s128 = sphi 0, %s112
      %s132 = sphi 0, %s132
      %s134 = sphi 0, %s132
      %s135 = sphi 0, %s134
      %s149 = sphi 0, %s135
      %s153 = sphi 0, %s153
      %s155 = sphi 0, %s153
      %s156 = sphi 0, %s155
      %s170 = sphi 0, %s156
      %s174 = sphi 0, %s174
      %s176 = sphi 0, %s174
      %s177 = sphi 0, %s176
      %s191 = sphi 0, %s177
      %s195 = sphi 0, %s195
      %s197 = sphi 0, %s195
      %s198 = sphi 0, %s197
      %s212 = sphi 0, %s198
      %s216 = sphi 0, %s216
      %s218 = sphi 0, %s216
      %s219 = sphi 0, %s218
      %s233 = sphi 0, %s219
      %s237 = sphi 0, %s237
      %s239 = sphi 0, %s237
      %s240 = sphi 0, %s239
      %s254 = sphi 0, %s240
      %s258 = sphi 0, %s258
      %s260 = sphi 0, %s258
      %s261 = sphi 0, %s260
      %s275 = sphi 0, %s261
      %s281 = sphi 0, %s283
      %s284 = sphi 0, %s281
      %s285 = sphi 0, %s284
      %s301 = sphi 0, %s285
    $region4: #{tpu_custom_call.1} parent=1 // loop_header_branch
      %23 = sbr.rel (%p21) target = $region8
    $region5: #{tpu_custom_call.1} parent=1 // loop_body
      %s25 = ssub.s32 %s20, 1
      %s26 = ssub.s32 %s20, 2
      %s27 = sadd.s32 %s20, 1
      %s28 = ssub.s32 %s20, %s27
      %p29 = scmp.eq.s32.totalorder %s28, 0
      %s31 = sadd.s32 %s30, 1
      %s32 = scalar_select %p29, %s30, %s31
      %p35 = pneg %p29
      %p36 = scmp.eq.s32.totalorder %s20, 1
      %p37 = por %p35, %p36
      %p38 = scmp.ne.s32.totalorder %s30, %s33
      %p39 = scmp.eq.s32.totalorder %s20, 0
      %p40 = por %p38, %p39
      %p41 = scmp.ne.s32.totalorder %s30, %s33
      %p42 = scmp.eq.s32.totalorder %s25, 1
      %p43 = por %p41, %p42
      %p44 = scmp.ne.s32.totalorder %s33, %s34
      %p45 = scmp.eq.s32.totalorder %s25, 0
      %p46 = por %p44, %p45
      %p47 = scmp.ne.s32.totalorder %s33, %s34
      %p48 = scmp.eq.s32.totalorder %s26, 1
      %p49 = por %p47, %p48
      %p51 = scmp.ne.s32.totalorder %s34, %s50
      %p52 = scmp.eq.s32.totalorder %s26, 0
      %p53 = por %p51, %p52
      %s54 = ssub.s32 %s20, %s27
      %p55 = scmp.eq.s32.totalorder %s54, 0
      %s57 = sadd.s32 %s56, 1
      %s58 = scalar_select %p55, %s56, %s57
      %p61 = pneg %p55
      %p62 = scmp.eq.s32.totalorder %s20, 1
      %p63 = por %p61, %p62
      %p64 = scmp.ne.s32.totalorder %s56, %s59
      %p65 = scmp.eq.s32.totalorder %s20, 0
      %p66 = por %p64, %p65
      %p67 = scmp.ne.s32.totalorder %s56, %s59
      %p68 = scmp.eq.s32.totalorder %s25, 1
      %p69 = por %p67, %p68
      %p70 = scmp.ne.s32.totalorder %s59, %s60
      %p71 = scmp.eq.s32.totalorder %s25, 0
      %p72 = por %p70, %p71
      %p73 = scmp.ne.s32.totalorder %s59, %s60
      %p74 = scmp.eq.s32.totalorder %s26, 1
      %p75 = por %p73, %p74
      %p77 = scmp.ne.s32.totalorder %s60, %s76
      %p78 = scmp.eq.s32.totalorder %s26, 0
      %p79 = por %p77, %p78
      %s80 = ssub.s32 %s20, %s27
      %p81 = scmp.eq.s32.totalorder %s80, 0
      %s83 = sadd.s32 %s82, 1
      %s84 = scalar_select %p81, %s82, %s83
      %p87 = pneg %p81
      %p88 = scmp.eq.s32.totalorder %s20, 1
      %p89 = por %p87, %p88
      %p90 = scmp.ne.s32.totalorder %s82, %s85
      %p91 = scmp.eq.s32.totalorder %s20, 0
      %p92 = por %p90, %p91
      %p93 = scmp.ne.s32.totalorder %s82, %s85
      %p94 = scmp.eq.s32.totalorder %s25, 1
      %p95 = por %p93, %p94
      %p96 = scmp.ne.s32.totalorder %s85, %s86
      %p97 = scmp.eq.s32.totalorder %s25, 0
      %p98 = por %p96, %p97
      %p99 = scmp.ne.s32.totalorder %s85, %s86
      %p100 = scmp.eq.s32.totalorder %s26, 1
      %p101 = por %p99, %p100
      %p103 = scmp.ne.s32.totalorder %s86, %s102
      %p104 = scmp.eq.s32.totalorder %s26, 0
      %p105 = por %p103, %p104
      %s106 = ssub.s32 %s20, %s27
      %p107 = scmp.eq.s32.totalorder %s106, 0
      %s109 = sadd.s32 %s108, 1
      %s110 = scalar_select %p107, %s108, %s109
      %p113 = pneg %p107
      %p114 = scmp.eq.s32.totalorder %s20, 1
      %p115 = por %p113, %p114
      %p116 = scmp.ne.s32.totalorder %s108, %s111
      %p117 = scmp.eq.s32.totalorder %s20, 0
      %p118 = por %p116, %p117
      %p119 = scmp.ne.s32.totalorder %s108, %s111
      %p120 = scmp.eq.s32.totalorder %s25, 1
      %p121 = por %p119, %p120
      %p122 = scmp.ne.s32.totalorder %s111, %s112
      %p123 = scmp.eq.s32.totalorder %s25, 0
      %p124 = por %p122, %p123
      %p125 = scmp.ne.s32.totalorder %s111, %s112
      %p126 = scmp.eq.s32.totalorder %s26, 1
      %p127 = por %p125, %p126
      %p129 = scmp.ne.s32.totalorder %s112, %s128
      %p130 = scmp.eq.s32.totalorder %s26, 0
      %p131 = por %p129, %p130
      %s133 = sadd.s32 %s132, 1
      %p136 = scmp.eq.s32.totalorder %s20, 1
      %p137 = scmp.ne.s32.totalorder %s132, %s134
      %p138 = scmp.eq.s32.totalorder %s20, 0
      %p139 = por %p137, %p138
      %p140 = scmp.ne.s32.totalorder %s132, %s134
      %p141 = scmp.eq.s32.totalorder %s25, 1
      %p142 = por %p140, %p141
      %p143 = scmp.ne.s32.totalorder %s134, %s135
      %p144 = scmp.eq.s32.totalorder %s25, 0
      %p145 = por %p143, %p144
      %p146 = scmp.ne.s32.totalorder %s134, %s135
      %p147 = scmp.eq.s32.totalorder %s26, 1
      %p148 = por %p146, %p147
      %p150 = scmp.ne.s32.totalorder %s135, %s149
      %p151 = scmp.eq.s32.totalorder %s26, 0
      %p152 = por %p150, %p151
      %s154 = sadd.s32 %s153, 1
      %p157 = scmp.eq.s32.totalorder %s20, 1
      %p158 = scmp.ne.s32.totalorder %s153, %s155
      %p159 = scmp.eq.s32.totalorder %s20, 0
      %p160 = por %p158, %p159
      %p161 = scmp.ne.s32.totalorder %s153, %s155
      %p162 = scmp.eq.s32.totalorder %s25, 1
      %p163 = por %p161, %p162
      %p164 = scmp.ne.s32.totalorder %s155, %s156
      %p165 = scmp.eq.s32.totalorder %s25, 0
      %p166 = por %p164, %p165
      %p167 = scmp.ne.s32.totalorder %s155, %s156
      %p168 = scmp.eq.s32.totalorder %s26, 1
      %p169 = por %p167, %p168
      %p171 = scmp.ne.s32.totalorder %s156, %s170
      %p172 = scmp.eq.s32.totalorder %s26, 0
      %p173 = por %p171, %p172
      %s175 = sadd.s32 %s174, 1
      %p178 = scmp.eq.s32.totalorder %s20, 1
      %p179 = scmp.ne.s32.totalorder %s174, %s176
      %p180 = scmp.eq.s32.totalorder %s20, 0
      %p181 = por %p179, %p180
      %p182 = scmp.ne.s32.totalorder %s174, %s176
      %p183 = scmp.eq.s32.totalorder %s25, 1
      %p184 = por %p182, %p183
      %p185 = scmp.ne.s32.totalorder %s176, %s177
      %p186 = scmp.eq.s32.totalorder %s25, 0
      %p187 = por %p185, %p186
      %p188 = scmp.ne.s32.totalorder %s176, %s177
      %p189 = scmp.eq.s32.totalorder %s26, 1
      %p190 = por %p188, %p189
      %p192 = scmp.ne.s32.totalorder %s177, %s191
      %p193 = scmp.eq.s32.totalorder %s26, 0
      %p194 = por %p192, %p193
      %s196 = sadd.s32 %s195, 1
      %p199 = scmp.eq.s32.totalorder %s20, 1
      %p200 = scmp.ne.s32.totalorder %s195, %s197
      %p201 = scmp.eq.s32.totalorder %s20, 0
      %p202 = por %p200, %p201
      %p203 = scmp.ne.s32.totalorder %s195, %s197
      %p204 = scmp.eq.s32.totalorder %s25, 1
      %p205 = por %p203, %p204
      %p206 = scmp.ne.s32.totalorder %s197, %s198
      %p207 = scmp.eq.s32.totalorder %s25, 0
      %p208 = por %p206, %p207
      %p209 = scmp.ne.s32.totalorder %s197, %s198
      %p210 = scmp.eq.s32.totalorder %s26, 1
      %p211 = por %p209, %p210
      %p213 = scmp.ne.s32.totalorder %s198, %s212
      %p214 = scmp.eq.s32.totalorder %s26, 0
      %p215 = por %p213, %p214
      %s217 = sadd.s32 %s216, 1
      %p220 = scmp.eq.s32.totalorder %s20, 1
      %p221 = scmp.ne.s32.totalorder %s216, %s218
      %p222 = scmp.eq.s32.totalorder %s20, 0
      %p223 = por %p221, %p222
      %p224 = scmp.ne.s32.totalorder %s216, %s218
      %p225 = scmp.eq.s32.totalorder %s25, 1
      %p226 = por %p224, %p225
      %p227 = scmp.ne.s32.totalorder %s218, %s219
      %p228 = scmp.eq.s32.totalorder %s25, 0
      %p229 = por %p227, %p228
      %p230 = scmp.ne.s32.totalorder %s218, %s219
      %p231 = scmp.eq.s32.totalorder %s26, 1
      %p232 = por %p230, %p231
      %p234 = scmp.ne.s32.totalorder %s219, %s233
      %p235 = scmp.eq.s32.totalorder %s26, 0
      %p236 = por %p234, %p235
      %s238 = sadd.s32 %s237, 1
      %p241 = scmp.eq.s32.totalorder %s20, 1
      %p242 = scmp.ne.s32.totalorder %s237, %s239
      %p243 = scmp.eq.s32.totalorder %s20, 0
      %p244 = por %p242, %p243
      %p245 = scmp.ne.s32.totalorder %s237, %s239
      %p246 = scmp.eq.s32.totalorder %s25, 1
      %p247 = por %p245, %p246
      %p248 = scmp.ne.s32.totalorder %s239, %s240
      %p249 = scmp.eq.s32.totalorder %s25, 0
      %p250 = por %p248, %p249
      %p251 = scmp.ne.s32.totalorder %s239, %s240
      %p252 = scmp.eq.s32.totalorder %s26, 1
      %p253 = por %p251, %p252
      %p255 = scmp.ne.s32.totalorder %s240, %s254
      %p256 = scmp.eq.s32.totalorder %s26, 0
      %p257 = por %p255, %p256
      %s259 = sadd.s32 %s258, 1
      %p262 = scmp.eq.s32.totalorder %s20, 1
      %p263 = scmp.ne.s32.totalorder %s258, %s260
      %p264 = scmp.eq.s32.totalorder %s20, 0
      %p265 = por %p263, %p264
      %p266 = scmp.ne.s32.totalorder %s258, %s260
      %p267 = scmp.eq.s32.totalorder %s25, 1
      %p268 = por %p266, %p267
      %p269 = scmp.ne.s32.totalorder %s260, %s261
      %p270 = scmp.eq.s32.totalorder %s25, 0
      %p271 = por %p269, %p270
      %p272 = scmp.ne.s32.totalorder %s260, %s261
      %p273 = scmp.eq.s32.totalorder %s26, 1
      %p274 = por %p272, %p273
      %p276 = scmp.ne.s32.totalorder %s261, %s275
      %p277 = scmp.eq.s32.totalorder %s26, 0
      %p278 = por %p276, %p277
      %s279 = ssub.s32 %s20, %s27
      %p280 = scmp.eq.s32.totalorder %s279, 0
      %s282 = sadd.s32 %s281, 1
      %s283 = scalar_select %p280, %s281, %s282
      %p286 = pneg %p280
      %p287 = scmp.eq.s32.totalorder %s20, 1
      %p288 = por %p286, %p287
      %p289 = scmp.ne.s32.totalorder %s281, %s284
      %p290 = scmp.eq.s32.totalorder %s20, 0
      %p291 = por %p289, %p290
      %p292 = scmp.ne.s32.totalorder %s281, %s284
      %p293 = scmp.eq.s32.totalorder %s25, 1
      %p294 = por %p292, %p293
      %p295 = scmp.ne.s32.totalorder %s284, %s285
      %p296 = scmp.eq.s32.totalorder %s25, 0
      %p297 = por %p295, %p296
      %p298 = scmp.ne.s32.totalorder %s284, %s285
      %p299 = scmp.eq.s32.totalorder %s26, 1
      %p300 = por %p298, %p299
      %p302 = scmp.ne.s32.totalorder %s285, %s301
      %p303 = scmp.eq.s32.totalorder %s26, 0
      %p304 = por %p302, %p303
      %p305 = scmp.le.s32.totalorder 1, %s20
      %p306 = scmp.lt.s32.totalorder %s20, 3
      %p307 = pnand %p305, %p306
      %p308 = pneg %p307
      // Predicated region
      $region9: #{tpu_custom_call.1} parent=5 // pred_check
        _
      $region10: #{tpu_custom_call.1} parent=5 // pred_check_branch
        %310 = sbr.rel (%p307) target = $region12
      $region11: #{tpu_custom_call.1} parent=5 // pred_region
        %s311 = ssub.s32 %s20, 1
        // Predicated region
        $region13: #{tpu_custom_call.1} parent=11 // pred_check
          %p312 = pneg %p145
        $region14: #{tpu_custom_call.1} parent=11 // pred_check_branch
          %314 = sbr.rel (%p312) target = $region16
        $region15: #{tpu_custom_call.1} parent=11 // pred_region
          _
        $region16: #{tpu_custom_call.1} parent=11 // pred_fallthru
          _
        // Predicated region
        $region17: #{tpu_custom_call.1} parent=11 // pred_check
          %p315 = pneg %p166
        $region18: #{tpu_custom_call.1} parent=11 // pred_check_branch
          %317 = sbr.rel (%p315) target = $region20
        $region19: #{tpu_custom_call.1} parent=11 // pred_region
          _
        $region20: #{tpu_custom_call.1} parent=11 // pred_fallthru
          _
        // Predicated region
        $region21: #{tpu_custom_call.1} parent=11 // pred_check
          %p318 = pneg %p187
        $region22: #{tpu_custom_call.1} parent=11 // pred_check_branch
          %320 = sbr.rel (%p318) target = $region24
        $region23: #{tpu_custom_call.1} parent=11 // pred_region
          _
        $region24: #{tpu_custom_call.1} parent=11 // pred_fallthru
          _
        // Predicated region
        $region25: #{tpu_custom_call.1} parent=11 // pred_check
          %p321 = pneg %p208
        $region26: #{tpu_custom_call.1} parent=11 // pred_check_branch
          %323 = sbr.rel (%p321) target = $region28
        $region27: #{tpu_custom_call.1} parent=11 // pred_region
          _
        $region28: #{tpu_custom_call.1} parent=11 // pred_fallthru
          _
        // Predicated region
        $region29: #{tpu_custom_call.1} parent=11 // pred_check
          %p324 = pneg %p229
        $region30: #{tpu_custom_call.1} parent=11 // pred_check_branch
          %326 = sbr.rel (%p324) target = $region32
        $region31: #{tpu_custom_call.1} parent=11 // pred_region
          _
        $region32: #{tpu_custom_call.1} parent=11 // pred_fallthru
          _
        // Predicated region
        $region33: #{tpu_custom_call.1} parent=11 // pred_check
          %p327 = pneg %p250
        $region34: #{tpu_custom_call.1} parent=11 // pred_check_branch
          %329 = sbr.rel (%p327) target = $region36
        $region35: #{tpu_custom_call.1} parent=11 // pred_region
          _
        $region36: #{tpu_custom_call.1} parent=11 // pred_fallthru
          _
        // Predicated region
        $region37: #{tpu_custom_call.1} parent=11 // pred_check
          %p330 = pneg %p271
        $region38: #{tpu_custom_call.1} parent=11 // pred_check_branch
          %332 = sbr.rel (%p330) target = $region40
        $region39: #{tpu_custom_call.1} parent=11 // pred_region
          _
        $region40: #{tpu_custom_call.1} parent=11 // pred_fallthru
          _
      $region12: #{tpu_custom_call.1} parent=5 // pred_fallthru
        _
      %p333 = scmp.lt.s32.totalorder %s20, 2
      // Predicated region
      $region41: #{tpu_custom_call.1} parent=5 // pred_check
        %p334 = pneg %p333
      $region42: #{tpu_custom_call.1} parent=5 // pred_check_branch
        %336 = sbr.rel (%p334) target = $region44
      $region43: #{tpu_custom_call.1} parent=5 // pred_region
        // Predicated region
        $region45: #{tpu_custom_call.1} parent=43 // pred_check
          %p337 = pneg %p40
        $region46: #{tpu_custom_call.1} parent=43 // pred_check_branch
          %339 = sbr.rel (%p337) target = $region48
        $region47: #{tpu_custom_call.1} parent=43 // pred_region
          %s340 = sand.u32 %s30, 1
          %s341 = sand.u32 %s30, 1
          %s342 = smul.addr %s341, 72
          %s343 = scalar_lea.vmem [#allocation2], %s342
          %s344 = smul.addr %s20, 8
          %s345 = scalar_lea.vmem %s0, %s344
          // Predicated region
          $region49: #{tpu_custom_call.1} parent=47 // pred_check
            _
          $region50: #{tpu_custom_call.1} parent=47 // pred_check_branch
            %347 = sbr.rel (0) target = $region52
          $region51: #{tpu_custom_call.1} parent=47 // pred_region
            // Predicated region
            $region53: #{tpu_custom_call.1} parent=51 // pred_check
              _
            $region54: #{tpu_custom_call.1} parent=51 // pred_check_branch
              %349 = sbr.rel (0) target = $region56
            $region55: #{tpu_custom_call.1} parent=51 // pred_region
              // Predicated region
              $region68: #{tpu_custom_call.1} parent=55 // pred_check
                _
              $region69: #{tpu_custom_call.1} parent=55 // pred_check_branch
                %380 = sbr.rel (0) target = $region71
              $region70: #{tpu_custom_call.1} parent=55 // pred_region
                loop: start=0, step=1, limit=1
                $region72: #{tpu_custom_call.1} parent=70 // loop_pre_header
                  _
                $region73: #{tpu_custom_call.1} parent=70 // loop_header
                  %s382 = sphi 0, %s386
                  %p383 = scmp.ge.s32.totalorder %s382, 1
                  %s387 = sphi %s345, %s345
                  %s388 = sphi %s343, %s343
                $region74: #{tpu_custom_call.1} parent=70 // loop_header_branch
                  %385 = sbr.rel (%p383) target = $region78
                $region75: #{tpu_custom_call.1} parent=70 // loop_body
                  %v389 = vld [vmem:[%s387] sm:$0xff]
                  %390 = vst [vmem:[%s388] sm:$0xff] %v389
                  %v391 = vld [vmem:[%s387 + $0x10] sm:$0xff]
                  %392 = vst [vmem:[%s388 + $0x8] sm:$0xff] %v391
                  %v393 = vld [vmem:[%s387 + $0x20] sm:$0xff]
                  %394 = vst [vmem:[%s388 + $0x10] sm:$0xff] %v393
                  %v395 = vld [vmem:[%s387 + $0x30] sm:$0xff]
                  %396 = vst [vmem:[%s388 + $0x18] sm:$0xff] %v395
                  %v397 = vld [vmem:[%s387 + $0x40] sm:$0xff]
                  %398 = vst [vmem:[%s388 + $0x20] sm:$0xff] %v397
                  %v399 = vld [vmem:[%s387 + $0x50] sm:$0xff]
                  %400 = vst [vmem:[%s388 + $0x28] sm:$0xff] %v399
                  %v401 = vld [vmem:[%s387 + $0x60] sm:$0xff]
                  %402 = vst [vmem:[%s388 + $0x30] sm:$0xff] %v401
                  %v403 = vld [vmem:[%s387 + $0x70] sm:$0xff]
                  %404 = vst [vmem:[%s388 + $0x38] sm:$0xff] %v403
                  %v405 = vld [vmem:[%s387 + $0x80] sm:$0xff]
                  %406 = vst [vmem:[%s388 + $0x40] sm:$0xff] %v405
                $region76: #{tpu_custom_call.1} parent=70 // loop_footer
                  %s386 = sadd.s32 1, %s382
                $region77: #{tpu_custom_call.1} parent=70 // loop_footer_branch
                  %381 = sbr.rel target = $region73
                $region78: #{tpu_custom_call.1} parent=70 // loop_exit
                  _
              $region71: #{tpu_custom_call.1} parent=55 // pred_fallthru
                _
              // Predicated region
              $region79: #{tpu_custom_call.1} parent=55 // pred_check
                _
              $region80: #{tpu_custom_call.1} parent=55 // pred_check_branch
                %408 = sbr.rel target = $region82
              $region81: #{tpu_custom_call.1} parent=55 // pred_region
                _
              $region82: #{tpu_custom_call.1} parent=55 // pred_fallthru
                _
            $region56: #{tpu_custom_call.1} parent=51 // pred_fallthru
              _
            // Predicated region
            $region57: #{tpu_custom_call.1} parent=51 // pred_check
              _
            $region58: #{tpu_custom_call.1} parent=51 // pred_check_branch
              %351 = sbr.rel target = $region60
            $region59: #{tpu_custom_call.1} parent=51 // pred_region
              loop: start=0, step=1, limit=1
              $region61: #{tpu_custom_call.1} parent=59 // loop_pre_header
                _
              $region62: #{tpu_custom_call.1} parent=59 // loop_header
                %s354 = sphi 0, %s358
                %p355 = scmp.ge.s32.totalorder %s354, 1
                %s359 = sphi %s345, %s345
                %s360 = sphi %s343, %s343
              $region63: #{tpu_custom_call.1} parent=59 // loop_header_branch
                %357 = sbr.rel (%p355) target = $region67
              $region64: #{tpu_custom_call.1} parent=59 // loop_body
                %v361 = vld [vmem:[%s359] sm:$0xff]
                %362 = vst [vmem:[%s360] sm:$0xff] %v361
                %v363 = vld [vmem:[%s359 + $0x10] sm:$0xff]
                %364 = vst [vmem:[%s360 + $0x8] sm:$0xff] %v363
                %v365 = vld [vmem:[%s359 + $0x20] sm:$0xff]
                %366 = vst [vmem:[%s360 + $0x10] sm:$0xff] %v365
                %v367 = vld [vmem:[%s359 + $0x30] sm:$0xff]
                %368 = vst [vmem:[%s360 + $0x18] sm:$0xff] %v367
                %v369 = vld [vmem:[%s359 + $0x40] sm:$0xff]
                %370 = vst [vmem:[%s360 + $0x20] sm:$0xff] %v369
                %v371 = vld [vmem:[%s359 + $0x50] sm:$0xff]
                %372 = vst [vmem:[%s360 + $0x28] sm:$0xff] %v371
                %v373 = vld [vmem:[%s359 + $0x60] sm:$0xff]
                %374 = vst [vmem:[%s360 + $0x30] sm:$0xff] %v373
                %v375 = vld [vmem:[%s359 + $0x70] sm:$0xff]
                %376 = vst [vmem:[%s360 + $0x38] sm:$0xff] %v375
                %v377 = vld [vmem:[%s359 + $0x80] sm:$0xff]
                %378 = vst [vmem:[%s360 + $0x40] sm:$0xff] %v377
              $region65: #{tpu_custom_call.1} parent=59 // loop_footer
                %s358 = sadd.s32 1, %s354
              $region66: #{tpu_custom_call.1} parent=59 // loop_footer_branch
                %353 = sbr.rel target = $region62
              $region67: #{tpu_custom_call.1} parent=59 // loop_exit
                _
            $region60: #{tpu_custom_call.1} parent=51 // pred_fallthru
              _
          $region52: #{tpu_custom_call.1} parent=47 // pred_fallthru
            _
          %409 = vnop
        $region48: #{tpu_custom_call.1} parent=43 // pred_fallthru
          _
        // Predicated region
        $region83: #{tpu_custom_call.1} parent=43 // pred_check
          %p410 = pneg %p66
        $region84: #{tpu_custom_call.1} parent=43 // pred_check_branch
          %412 = sbr.rel (%p410) target = $region86
        $region85: #{tpu_custom_call.1} parent=43 // pred_region
          %s413 = sand.u32 %s56, 1
          %s414 = sand.u32 %s56, 1
          %s415 = smul.addr %s414, 576
          %s416 = scalar_lea.vmem [#allocation3], %s415
          %s417 = smul.addr %s20, 8
          %s418 = scalar_lea.vmem %s1, %s417
          // Predicated region
          $region87: #{tpu_custom_call.1} parent=85 // pred_check
            _
          $region88: #{tpu_custom_call.1} parent=85 // pred_check_branch
            %420 = sbr.rel (0) target = $region90
          $region89: #{tpu_custom_call.1} parent=85 // pred_region
            // Predicated region
            $region91: #{tpu_custom_call.1} parent=89 // pred_check
              _
            $region92: #{tpu_custom_call.1} parent=89 // pred_check_branch
              %422 = sbr.rel (0) target = $region94
            $region93: #{tpu_custom_call.1} parent=89 // pred_region
              // Predicated region
              $region106: #{tpu_custom_call.1} parent=93 // pred_check
                _
              $region107: #{tpu_custom_call.1} parent=93 // pred_check_branch
                %579 = sbr.rel (0) target = $region109
              $region108: #{tpu_custom_call.1} parent=93 // pred_region
                loop: start=0, step=1, limit=1
                $region110: #{tpu_custom_call.1} parent=108 // loop_pre_header
                  _
                $region111: #{tpu_custom_call.1} parent=108 // loop_header
                  %s581 = sphi 0, %s585
                  %p582 = scmp.ge.s32.totalorder %s581, 1
                  %s586 = sphi %s418, %s418
                  %s587 = sphi %s416, %s416
                $region112: #{tpu_custom_call.1} parent=108 // loop_header_branch
                  %584 = sbr.rel (%p582) target = $region116
                $region113: #{tpu_custom_call.1} parent=108 // loop_body
                  %v588 = vld [vmem:[%s586] sm:$0xff]
                  %589 = vst [vmem:[%s587] sm:$0xff] %v588
                  %v590 = vld [vmem:[%s586 + $0x10] sm:$0xff]
                  %591 = vst [vmem:[%s587 + $0x8] sm:$0xff] %v590
                  %v592 = vld [vmem:[%s586 + $0x20] sm:$0xff]
                  %593 = vst [vmem:[%s587 + $0x10] sm:$0xff] %v592
                  %v594 = vld [vmem:[%s586 + $0x30] sm:$0xff]
                  %595 = vst [vmem:[%s587 + $0x18] sm:$0xff] %v594
                  %v596 = vld [vmem:[%s586 + $0x40] sm:$0xff]
                  %597 = vst [vmem:[%s587 + $0x20] sm:$0xff] %v596
                  %v598 = vld [vmem:[%s586 + $0x50] sm:$0xff]
                  %599 = vst [vmem:[%s587 + $0x28] sm:$0xff] %v598
                  %v600 = vld [vmem:[%s586 + $0x60] sm:$0xff]
                  %601 = vst [vmem:[%s587 + $0x30] sm:$0xff] %v600
                  %v602 = vld [vmem:[%s586 + $0x70] sm:$0xff]
                  %603 = vst [vmem:[%s587 + $0x38] sm:$0xff] %v602
                  %v604 = vld [vmem:[%s586 + $0x80] sm:$0xff]
                  %605 = vst [vmem:[%s587 + $0x40] sm:$0xff] %v604
                  %v606 = vld [vmem:[%s586 + $0x90] sm:$0xff]
                  %607 = vst [vmem:[%s587 + $0x48] sm:$0xff] %v606
                  %v608 = vld [vmem:[%s586 + $0xa0] sm:$0xff]
                  %609 = vst [vmem:[%s587 + $0x50] sm:$0xff] %v608
                  %v610 = vld [vmem:[%s586 + $0xb0] sm:$0xff]
                  %611 = vst [vmem:[%s587 + $0x58] sm:$0xff] %v610
                  %v612 = vld [vmem:[%s586 + $0xc0] sm:$0xff]
                  %613 = vst [vmem:[%s587 + $0x60] sm:$0xff] %v612
                  %v614 = vld [vmem:[%s586 + $0xd0] sm:$0xff]
                  %615 = vst [vmem:[%s587 + $0x68] sm:$0xff] %v614
                  %v616 = vld [vmem:[%s586 + $0xe0] sm:$0xff]
                  %617 = vst [vmem:[%s587 + $0x70] sm:$0xff] %v616
                  %v618 = vld [vmem:[%s586 + $0xf0] sm:$0xff]
                  %619 = vst [vmem:[%s587 + $0x78] sm:$0xff] %v618
                  %v620 = vld [vmem:[%s586 + $0x100] sm:$0xff]
                  %621 = vst [vmem:[%s587 + $0x80] sm:$0xff] %v620
                  %v622 = vld [vmem:[%s586 + $0x110] sm:$0xff]
                  %623 = vst [vmem:[%s587 + $0x88] sm:$0xff] %v622
                  %v624 = vld [vmem:[%s586 + $0x120] sm:$0xff]
                  %625 = vst [vmem:[%s587 + $0x90] sm:$0xff] %v624
                  %v626 = vld [vmem:[%s586 + $0x130] sm:$0xff]
                  %627 = vst [vmem:[%s587 + $0x98] sm:$0xff] %v626
                  %v628 = vld [vmem:[%s586 + $0x140] sm:$0xff]
                  %629 = vst [vmem:[%s587 + $0xa0] sm:$0xff] %v628
                  %v630 = vld [vmem:[%s586 + $0x150] sm:$0xff]
                  %631 = vst [vmem:[%s587 + $0xa8] sm:$0xff] %v630
                  %v632 = vld [vmem:[%s586 + $0x160] sm:$0xff]
                  %633 = vst [vmem:[%s587 + $0xb0] sm:$0xff] %v632
                  %v634 = vld [vmem:[%s586 + $0x170] sm:$0xff]
                  %635 = vst [vmem:[%s587 + $0xb8] sm:$0xff] %v634
                  %v636 = vld [vmem:[%s586 + $0x180] sm:$0xff]
                  %637 = vst [vmem:[%s587 + $0xc0] sm:$0xff] %v636
                  %v638 = vld [vmem:[%s586 + $0x190] sm:$0xff]
                  %639 = vst [vmem:[%s587 + $0xc8] sm:$0xff] %v638
                  %v640 = vld [vmem:[%s586 + $0x1a0] sm:$0xff]
                  %641 = vst [vmem:[%s587 + $0xd0] sm:$0xff] %v640
                  %v642 = vld [vmem:[%s586 + $0x1b0] sm:$0xff]
                  %643 = vst [vmem:[%s587 + $0xd8] sm:$0xff] %v642
                  %v644 = vld [vmem:[%s586 + $0x1c0] sm:$0xff]
                  %645 = vst [vmem:[%s587 + $0xe0] sm:$0xff] %v644
                  %v646 = vld [vmem:[%s586 + $0x1d0] sm:$0xff]
                  %647 = vst [vmem:[%s587 + $0xe8] sm:$0xff] %v646
                  %v648 = vld [vmem:[%s586 + $0x1e0] sm:$0xff]
                  %649 = vst [vmem:[%s587 + $0xf0] sm:$0xff] %v648
                  %v650 = vld [vmem:[%s586 + $0x1f0] sm:$0xff]
                  %651 = vst [vmem:[%s587 + $0xf8] sm:$0xff] %v650
                  %v652 = vld [vmem:[%s586 + $0x200] sm:$0xff]
                  %653 = vst [vmem:[%s587 + $0x100] sm:$0xff] %v652
                  %v654 = vld [vmem:[%s586 + $0x210] sm:$0xff]
                  %655 = vst [vmem:[%s587 + $0x108] sm:$0xff] %v654
                  %v656 = vld [vmem:[%s586 + $0x220] sm:$0xff]
                  %657 = vst [vmem:[%s587 + $0x110] sm:$0xff] %v656
                  %v658 = vld [vmem:[%s586 + $0x230] sm:$0xff]
                  %659 = vst [vmem:[%s587 + $0x118] sm:$0xff] %v658
                  %v660 = vld [vmem:[%s586 + $0x240] sm:$0xff]
                  %661 = vst [vmem:[%s587 + $0x120] sm:$0xff] %v660
                  %v662 = vld [vmem:[%s586 + $0x250] sm:$0xff]
                  %663 = vst [vmem:[%s587 + $0x128] sm:$0xff] %v662
                  %v664 = vld [vmem:[%s586 + $0x260] sm:$0xff]
                  %665 = vst [vmem:[%s587 + $0x130] sm:$0xff] %v664
                  %v666 = vld [vmem:[%s586 + $0x270] sm:$0xff]
                  %667 = vst [vmem:[%s587 + $0x138] sm:$0xff] %v666
                  %v668 = vld [vmem:[%s586 + $0x280] sm:$0xff]
                  %669 = vst [vmem:[%s587 + $0x140] sm:$0xff] %v668
                  %v670 = vld [vmem:[%s586 + $0x290] sm:$0xff]
                  %671 = vst [vmem:[%s587 + $0x148] sm:$0xff] %v670
                  %v672 = vld [vmem:[%s586 + $0x2a0] sm:$0xff]
                  %673 = vst [vmem:[%s587 + $0x150] sm:$0xff] %v672
                  %v674 = vld [vmem:[%s586 + $0x2b0] sm:$0xff]
                  %675 = vst [vmem:[%s587 + $0x158] sm:$0xff] %v674
                  %v676 = vld [vmem:[%s586 + $0x2c0] sm:$0xff]
                  %677 = vst [vmem:[%s587 + $0x160] sm:$0xff] %v676
                  %v678 = vld [vmem:[%s586 + $0x2d0] sm:$0xff]
                  %679 = vst [vmem:[%s587 + $0x168] sm:$0xff] %v678
                  %v680 = vld [vmem:[%s586 + $0x2e0] sm:$0xff]
                  %681 = vst [vmem:[%s587 + $0x170] sm:$0xff] %v680
                  %v682 = vld [vmem:[%s586 + $0x2f0] sm:$0xff]
                  %683 = vst [vmem:[%s587 + $0x178] sm:$0xff] %v682
                  %v684 = vld [vmem:[%s586 + $0x300] sm:$0xff]
                  %685 = vst [vmem:[%s587 + $0x180] sm:$0xff] %v684
                  %v686 = vld [vmem:[%s586 + $0x310] sm:$0xff]
                  %687 = vst [vmem:[%s587 + $0x188] sm:$0xff] %v686
                  %v688 = vld [vmem:[%s586 + $0x320] sm:$0xff]
                  %689 = vst [vmem:[%s587 + $0x190] sm:$0xff] %v688
                  %v690 = vld [vmem:[%s586 + $0x330] sm:$0xff]
                  %691 = vst [vmem:[%s587 + $0x198] sm:$0xff] %v690
                  %v692 = vld [vmem:[%s586 + $0x340] sm:$0xff]
                  %693 = vst [vmem:[%s587 + $0x1a0] sm:$0xff] %v692
                  %v694 = vld [vmem:[%s586 + $0x350] sm:$0xff]
                  %695 = vst [vmem:[%s587 + $0x1a8] sm:$0xff] %v694
                  %v696 = vld [vmem:[%s586 + $0x360] sm:$0xff]
                  %697 = vst [vmem:[%s587 + $0x1b0] sm:$0xff] %v696
                  %v698 = vld [vmem:[%s586 + $0x370] sm:$0xff]
                  %699 = vst [vmem:[%s587 + $0x1b8] sm:$0xff] %v698
                  %v700 = vld [vmem:[%s586 + $0x380] sm:$0xff]
                  %701 = vst [vmem:[%s587 + $0x1c0] sm:$0xff] %v700
                  %v702 = vld [vmem:[%s586 + $0x390] sm:$0xff]
                  %703 = vst [vmem:[%s587 + $0x1c8] sm:$0xff] %v702
                  %v704 = vld [vmem:[%s586 + $0x3a0] sm:$0xff]
                  %705 = vst [vmem:[%s587 + $0x1d0] sm:$0xff] %v704
                  %v706 = vld [vmem:[%s586 + $0x3b0] sm:$0xff]
                  %707 = vst [vmem:[%s587 + $0x1d8] sm:$0xff] %v706
                  %v708 = vld [vmem:[%s586 + $0x3c0] sm:$0xff]
                  %709 = vst [vmem:[%s587 + $0x1e0] sm:$0xff] %v708
                  %v710 = vld [vmem:[%s586 + $0x3d0] sm:$0xff]
                  %711 = vst [vmem:[%s587 + $0x1e8] sm:$0xff] %v710
                  %v712 = vld [vmem:[%s586 + $0x3e0] sm:$0xff]
                  %713 = vst [vmem:[%s587 + $0x1f0] sm:$0xff] %v712
                  %v714 = vld [vmem:[%s586 + $0x3f0] sm:$0xff]
                  %715 = vst [vmem:[%s587 + $0x1f8] sm:$0xff] %v714
                  %v716 = vld [vmem:[%s586 + $0x400] sm:$0xff]
                  %717 = vst [vmem:[%s587 + $0x200] sm:$0xff] %v716
                  %v718 = vld [vmem:[%s586 + $0x410] sm:$0xff]
                  %719 = vst [vmem:[%s587 + $0x208] sm:$0xff] %v718
                  %v720 = vld [vmem:[%s586 + $0x420] sm:$0xff]
                  %721 = vst [vmem:[%s587 + $0x210] sm:$0xff] %v720
                  %v722 = vld [vmem:[%s586 + $0x430] sm:$0xff]
                  %723 = vst [vmem:[%s587 + $0x218] sm:$0xff] %v722
                  %v724 = vld [vmem:[%s586 + $0x440] sm:$0xff]
                  %725 = vst [vmem:[%s587 + $0x220] sm:$0xff] %v724
                  %v726 = vld [vmem:[%s586 + $0x450] sm:$0xff]
                  %727 = vst [vmem:[%s587 + $0x228] sm:$0xff] %v726
                  %v728 = vld [vmem:[%s586 + $0x460] sm:$0xff]
                  %729 = vst [vmem:[%s587 + $0x230] sm:$0xff] %v728
                  %v730 = vld [vmem:[%s586 + $0x470] sm:$0xff]
                  %731 = vst [vmem:[%s587 + $0x238] sm:$0xff] %v730
                $region114: #{tpu_custom_call.1} parent=108 // loop_footer
                  %s585 = sadd.s32 1, %s581
                $region115: #{tpu_custom_call.1} parent=108 // loop_footer_branch
                  %580 = sbr.rel target = $region111
                $region116: #{tpu_custom_call.1} parent=108 // loop_exit
                  _
              $region109: #{tpu_custom_call.1} parent=93 // pred_fallthru
                _
              // Predicated region
              $region117: #{tpu_custom_call.1} parent=93 // pred_check
                _
              $region118: #{tpu_custom_call.1} parent=93 // pred_check_branch
                %733 = sbr.rel target = $region120
              $region119: #{tpu_custom_call.1} parent=93 // pred_region
                _
              $region120: #{tpu_custom_call.1} parent=93 // pred_fallthru
                _
            $region94: #{tpu_custom_call.1} parent=89 // pred_fallthru
              _
            // Predicated region
            $region95: #{tpu_custom_call.1} parent=89 // pred_check
              _
            $region96: #{tpu_custom_call.1} parent=89 // pred_check_branch
              %424 = sbr.rel target = $region98
            $region97: #{tpu_custom_call.1} parent=89 // pred_region
              loop: start=0, step=1, limit=1
              $region99: #{tpu_custom_call.1} parent=97 // loop_pre_header
                _
              $region100: #{tpu_custom_call.1} parent=97 // loop_header
                %s427 = sphi 0, %s431
                %p428 = scmp.ge.s32.totalorder %s427, 1
                %s432 = sphi %s418, %s418
                %s433 = sphi %s416, %s416
              $region101: #{tpu_custom_call.1} parent=97 // loop_header_branch
                %430 = sbr.rel (%p428) target = $region105
              $region102: #{tpu_custom_call.1} parent=97 // loop_body
                %v434 = vld [vmem:[%s432] sm:$0xff]
                %435 = vst [vmem:[%s433] sm:$0xff] %v434
                %v436 = vld [vmem:[%s432 + $0x10] sm:$0xff]
                %437 = vst [vmem:[%s433 + $0x8] sm:$0xff] %v436
                %v438 = vld [vmem:[%s432 + $0x20] sm:$0xff]
                %439 = vst [vmem:[%s433 + $0x10] sm:$0xff] %v438
                %v440 = vld [vmem:[%s432 + $0x30] sm:$0xff]
                %441 = vst [vmem:[%s433 + $0x18] sm:$0xff] %v440
                %v442 = vld [vmem:[%s432 + $0x40] sm:$0xff]
                %443 = vst [vmem:[%s433 + $0x20] sm:$0xff] %v442
                %v444 = vld [vmem:[%s432 + $0x50] sm:$0xff]
                %445 = vst [vmem:[%s433 + $0x28] sm:$0xff] %v444
                %v446 = vld [vmem:[%s432 + $0x60] sm:$0xff]
                %447 = vst [vmem:[%s433 + $0x30] sm:$0xff] %v446
                %v448 = vld [vmem:[%s432 + $0x70] sm:$0xff]
                %449 = vst [vmem:[%s433 + $0x38] sm:$0xff] %v448
                %v450 = vld [vmem:[%s432 + $0x80] sm:$0xff]
                %451 = vst [vmem:[%s433 + $0x40] sm:$0xff] %v450
                %v452 = vld [vmem:[%s432 + $0x90] sm:$0xff]
                %453 = vst [vmem:[%s433 + $0x48] sm:$0xff] %v452
                %v454 = vld [vmem:[%s432 + $0xa0] sm:$0xff]
                %455 = vst [vmem:[%s433 + $0x50] sm:$0xff] %v454
                %v456 = vld [vmem:[%s432 + $0xb0] sm:$0xff]
                %457 = vst [vmem:[%s433 + $0x58] sm:$0xff] %v456
                %v458 = vld [vmem:[%s432 + $0xc0] sm:$0xff]
                %459 = vst [vmem:[%s433 + $0x60] sm:$0xff] %v458
                %v460 = vld [vmem:[%s432 + $0xd0] sm:$0xff]
                %461 = vst [vmem:[%s433 + $0x68] sm:$0xff] %v460
                %v462 = vld [vmem:[%s432 + $0xe0] sm:$0xff]
                %463 = vst [vmem:[%s433 + $0x70] sm:$0xff] %v462
                %v464 = vld [vmem:[%s432 + $0xf0] sm:$0xff]
                %465 = vst [vmem:[%s433 + $0x78] sm:$0xff] %v464
                %v466 = vld [vmem:[%s432 + $0x100] sm:$0xff]
                %467 = vst [vmem:[%s433 + $0x80] sm:$0xff] %v466
                %v468 = vld [vmem:[%s432 + $0x110] sm:$0xff]
                %469 = vst [vmem:[%s433 + $0x88] sm:$0xff] %v468
                %v470 = vld [vmem:[%s432 + $0x120] sm:$0xff]
                %471 = vst [vmem:[%s433 + $0x90] sm:$0xff] %v470
                %v472 = vld [vmem:[%s432 + $0x130] sm:$0xff]
                %473 = vst [vmem:[%s433 + $0x98] sm:$0xff] %v472
                %v474 = vld [vmem:[%s432 + $0x140] sm:$0xff]
                %475 = vst [vmem:[%s433 + $0xa0] sm:$0xff] %v474
                %v476 = vld [vmem:[%s432 + $0x150] sm:$0xff]
                %477 = vst [vmem:[%s433 + $0xa8] sm:$0xff] %v476
                %v478 = vld [vmem:[%s432 + $0x160] sm:$0xff]
                %479 = vst [vmem:[%s433 + $0xb0] sm:$0xff] %v478
                %v480 = vld [vmem:[%s432 + $0x170] sm:$0xff]
                %481 = vst [vmem:[%s433 + $0xb8] sm:$0xff] %v480
                %v482 = vld [vmem:[%s432 + $0x180] sm:$0xff]
                %483 = vst [vmem:[%s433 + $0xc0] sm:$0xff] %v482
                %v484 = vld [vmem:[%s432 + $0x190] sm:$0xff]
                %485 = vst [vmem:[%s433 + $0xc8] sm:$0xff] %v484
                %v486 = vld [vmem:[%s432 + $0x1a0] sm:$0xff]
                %487 = vst [vmem:[%s433 + $0xd0] sm:$0xff] %v486
                %v488 = vld [vmem:[%s432 + $0x1b0] sm:$0xff]
                %489 = vst [vmem:[%s433 + $0xd8] sm:$0xff] %v488
                %v490 = vld [vmem:[%s432 + $0x1c0] sm:$0xff]
                %491 = vst [vmem:[%s433 + $0xe0] sm:$0xff] %v490
                %v492 = vld [vmem:[%s432 + $0x1d0] sm:$0xff]
                %493 = vst [vmem:[%s433 + $0xe8] sm:$0xff] %v492
                %v494 = vld [vmem:[%s432 + $0x1e0] sm:$0xff]
                %495 = vst [vmem:[%s433 + $0xf0] sm:$0xff] %v494
                %v496 = vld [vmem:[%s432 + $0x1f0] sm:$0xff]
                %497 = vst [vmem:[%s433 + $0xf8] sm:$0xff] %v496
                %v498 = vld [vmem:[%s432 + $0x200] sm:$0xff]
                %499 = vst [vmem:[%s433 + $0x100] sm:$0xff] %v498
                %v500 = vld [vmem:[%s432 + $0x210] sm:$0xff]
                %501 = vst [vmem:[%s433 + $0x108] sm:$0xff] %v500
                %v502 = vld [vmem:[%s432 + $0x220] sm:$0xff]
                %503 = vst [vmem:[%s433 + $0x110] sm:$0xff] %v502
                %v504 = vld [vmem:[%s432 + $0x230] sm:$0xff]
                %505 = vst [vmem:[%s433 + $0x118] sm:$0xff] %v504
                %v506 = vld [vmem:[%s432 + $0x240] sm:$0xff]
                %507 = vst [vmem:[%s433 + $0x120] sm:$0xff] %v506
                %v508 = vld [vmem:[%s432 + $0x250] sm:$0xff]
                %509 = vst [vmem:[%s433 + $0x128] sm:$0xff] %v508
                %v510 = vld [vmem:[%s432 + $0x260] sm:$0xff]
                %511 = vst [vmem:[%s433 + $0x130] sm:$0xff] %v510
                %v512 = vld [vmem:[%s432 + $0x270] sm:$0xff]
                %513 = vst [vmem:[%s433 + $0x138] sm:$0xff] %v512
                %v514 = vld [vmem:[%s432 + $0x280] sm:$0xff]
                %515 = vst [vmem:[%s433 + $0x140] sm:$0xff] %v514
                %v516 = vld [vmem:[%s432 + $0x290] sm:$0xff]
                %517 = vst [vmem:[%s433 + $0x148] sm:$0xff] %v516
                %v518 = vld [vmem:[%s432 + $0x2a0] sm:$0xff]
                %519 = vst [vmem:[%s433 + $0x150] sm:$0xff] %v518
                %v520 = vld [vmem:[%s432 + $0x2b0] sm:$0xff]
                %521 = vst [vmem:[%s433 + $0x158] sm:$0xff] %v520
                %v522 = vld [vmem:[%s432 + $0x2c0] sm:$0xff]
                %523 = vst [vmem:[%s433 + $0x160] sm:$0xff] %v522
                %v524 = vld [vmem:[%s432 + $0x2d0] sm:$0xff]
                %525 = vst [vmem:[%s433 + $0x168] sm:$0xff] %v524
                %v526 = vld [vmem:[%s432 + $0x2e0] sm:$0xff]
                %527 = vst [vmem:[%s433 + $0x170] sm:$0xff] %v526
                %v528 = vld [vmem:[%s432 + $0x2f0] sm:$0xff]
                %529 = vst [vmem:[%s433 + $0x178] sm:$0xff] %v528
                %v530 = vld [vmem:[%s432 + $0x300] sm:$0xff]
                %531 = vst [vmem:[%s433 + $0x180] sm:$0xff] %v530
                %v532 = vld [vmem:[%s432 + $0x310] sm:$0xff]
                %533 = vst [vmem:[%s433 + $0x188] sm:$0xff] %v532
                %v534 = vld [vmem:[%s432 + $0x320] sm:$0xff]
                %535 = vst [vmem:[%s433 + $0x190] sm:$0xff] %v534
                %v536 = vld [vmem:[%s432 + $0x330] sm:$0xff]
                %537 = vst [vmem:[%s433 + $0x198] sm:$0xff] %v536
                %v538 = vld [vmem:[%s432 + $0x340] sm:$0xff]
                %539 = vst [vmem:[%s433 + $0x1a0] sm:$0xff] %v538
                %v540 = vld [vmem:[%s432 + $0x350] sm:$0xff]
                %541 = vst [vmem:[%s433 + $0x1a8] sm:$0xff] %v540
                %v542 = vld [vmem:[%s432 + $0x360] sm:$0xff]
                %543 = vst [vmem:[%s433 + $0x1b0] sm:$0xff] %v542
                %v544 = vld [vmem:[%s432 + $0x370] sm:$0xff]
                %545 = vst [vmem:[%s433 + $0x1b8] sm:$0xff] %v544
                %v546 = vld [vmem:[%s432 + $0x380] sm:$0xff]
                %547 = vst [vmem:[%s433 + $0x1c0] sm:$0xff] %v546
                %v548 = vld [vmem:[%s432 + $0x390] sm:$0xff]
                %549 = vst [vmem:[%s433 + $0x1c8] sm:$0xff] %v548
                %v550 = vld [vmem:[%s432 + $0x3a0] sm:$0xff]
                %551 = vst [vmem:[%s433 + $0x1d0] sm:$0xff] %v550
                %v552 = vld [vmem:[%s432 + $0x3b0] sm:$0xff]
                %553 = vst [vmem:[%s433 + $0x1d8] sm:$0xff] %v552
                %v554 = vld [vmem:[%s432 + $0x3c0] sm:$0xff]
                %555 = vst [vmem:[%s433 + $0x1e0] sm:$0xff] %v554
                %v556 = vld [vmem:[%s432 + $0x3d0] sm:$0xff]
                %557 = vst [vmem:[%s433 + $0x1e8] sm:$0xff] %v556
                %v558 = vld [vmem:[%s432 + $0x3e0] sm:$0xff]
                %559 = vst [vmem:[%s433 + $0x1f0] sm:$0xff] %v558
                %v560 = vld [vmem:[%s432 + $0x3f0] sm:$0xff]
                %561 = vst [vmem:[%s433 + $0x1f8] sm:$0xff] %v560
                %v562 = vld [vmem:[%s432 + $0x400] sm:$0xff]
                %563 = vst [vmem:[%s433 + $0x200] sm:$0xff] %v562
                %v564 = vld [vmem:[%s432 + $0x410] sm:$0xff]
                %565 = vst [vmem:[%s433 + $0x208] sm:$0xff] %v564
                %v566 = vld [vmem:[%s432 + $0x420] sm:$0xff]
                %567 = vst [vmem:[%s433 + $0x210] sm:$0xff] %v566
                %v568 = vld [vmem:[%s432 + $0x430] sm:$0xff]
                %569 = vst [vmem:[%s433 + $0x218] sm:$0xff] %v568
                %v570 = vld [vmem:[%s432 + $0x440] sm:$0xff]
                %571 = vst [vmem:[%s433 + $0x220] sm:$0xff] %v570
                %v572 = vld [vmem:[%s432 + $0x450] sm:$0xff]
                %573 = vst [vmem:[%s433 + $0x228] sm:$0xff] %v572
                %v574 = vld [vmem:[%s432 + $0x460] sm:$0xff]
                %575 = vst [vmem:[%s433 + $0x230] sm:$0xff] %v574
                %v576 = vld [vmem:[%s432 + $0x470] sm:$0xff]
                %577 = vst [vmem:[%s433 + $0x238] sm:$0xff] %v576
              $region103: #{tpu_custom_call.1} parent=97 // loop_footer
                %s431 = sadd.s32 1, %s427
              $region104: #{tpu_custom_call.1} parent=97 // loop_footer_branch
                %426 = sbr.rel target = $region100
              $region105: #{tpu_custom_call.1} parent=97 // loop_exit
                _
            $region98: #{tpu_custom_call.1} parent=89 // pred_fallthru
              _
          $region90: #{tpu_custom_call.1} parent=85 // pred_fallthru
            _
          %734 = vnop
        $region86: #{tpu_custom_call.1} parent=43 // pred_fallthru
          _
        // Predicated region
        $region121: #{tpu_custom_call.1} parent=43 // pred_check
          %p735 = pneg %p92
        $region122: #{tpu_custom_call.1} parent=43 // pred_check_branch
          %737 = sbr.rel (%p735) target = $region124
        $region123: #{tpu_custom_call.1} parent=43 // pred_region
          %p738 = scmp.lt.s32.totalorder %s20, 1
          %s739 = scalar_select %p738, %s20, 1
          %s740 = smul.addr %s739, 8
          %s741 = scalar_lea.vmem %s2, %s740
        $region124: #{tpu_custom_call.1} parent=43 // pred_fallthru
          _
        // Predicated region
        $region125: #{tpu_custom_call.1} parent=43 // pred_check
          %p742 = pneg %p118
        $region126: #{tpu_custom_call.1} parent=43 // pred_check_branch
          %744 = sbr.rel (%p742) target = $region128
        $region127: #{tpu_custom_call.1} parent=43 // pred_region
          %s745 = sand.u32 %s108, 1
          %s746 = sand.u32 %s108, 1
          %s747 = smul.addr %s746, 64
          %s748 = scalar_lea.vmem [#allocation4], %s747
          %s749 = smul.addr %s20, 8
          %s750 = scalar_lea.vmem %s3, %s749
          // Predicated region
          $region129: #{tpu_custom_call.1} parent=127 // pred_check
            _
          $region130: #{tpu_custom_call.1} parent=127 // pred_check_branch
            %752 = sbr.rel (0) target = $region132
          $region131: #{tpu_custom_call.1} parent=127 // pred_region
            // Predicated region
            $region133: #{tpu_custom_call.1} parent=131 // pred_check
              _
            $region134: #{tpu_custom_call.1} parent=131 // pred_check_branch
              %754 = sbr.rel (0) target = $region136
            $region135: #{tpu_custom_call.1} parent=131 // pred_region
              // Predicated region
              $region148: #{tpu_custom_call.1} parent=135 // pred_check
                _
              $region149: #{tpu_custom_call.1} parent=135 // pred_check_branch
                %783 = sbr.rel (0) target = $region151
              $region150: #{tpu_custom_call.1} parent=135 // pred_region
                loop: start=0, step=1, limit=1
                $region152: #{tpu_custom_call.1} parent=150 // loop_pre_header
                  _
                $region153: #{tpu_custom_call.1} parent=150 // loop_header
                  %s785 = sphi 0, %s789
                  %p786 = scmp.ge.s32.totalorder %s785, 1
                  %s790 = sphi %s750, %s750
                  %s791 = sphi %s748, %s748
                $region154: #{tpu_custom_call.1} parent=150 // loop_header_branch
                  %788 = sbr.rel (%p786) target = $region158
                $region155: #{tpu_custom_call.1} parent=150 // loop_body
                  %v792 = vld [vmem:[%s790] sm:$0xff]
                  %793 = vst [vmem:[%s791] sm:$0xff] %v792
                  %v794 = vld [vmem:[%s790 + $0x10] sm:$0xff]
                  %795 = vst [vmem:[%s791 + $0x8] sm:$0xff] %v794
                  %v796 = vld [vmem:[%s790 + $0x20] sm:$0xff]
                  %797 = vst [vmem:[%s791 + $0x10] sm:$0xff] %v796
                  %v798 = vld [vmem:[%s790 + $0x30] sm:$0xff]
                  %799 = vst [vmem:[%s791 + $0x18] sm:$0xff] %v798
                  %v800 = vld [vmem:[%s790 + $0x40] sm:$0xff]
                  %801 = vst [vmem:[%s791 + $0x20] sm:$0xff] %v800
                  %v802 = vld [vmem:[%s790 + $0x50] sm:$0xff]
                  %803 = vst [vmem:[%s791 + $0x28] sm:$0xff] %v802
                  %v804 = vld [vmem:[%s790 + $0x60] sm:$0xff]
                  %805 = vst [vmem:[%s791 + $0x30] sm:$0xff] %v804
                  %v806 = vld [vmem:[%s790 + $0x70] sm:$0xff]
                  %807 = vst [vmem:[%s791 + $0x38] sm:$0xff] %v806
                $region156: #{tpu_custom_call.1} parent=150 // loop_footer
                  %s789 = sadd.s32 1, %s785
                $region157: #{tpu_custom_call.1} parent=150 // loop_footer_branch
                  %784 = sbr.rel target = $region153
                $region158: #{tpu_custom_call.1} parent=150 // loop_exit
                  _
              $region151: #{tpu_custom_call.1} parent=135 // pred_fallthru
                _
              // Predicated region
              $region159: #{tpu_custom_call.1} parent=135 // pred_check
                _
              $region160: #{tpu_custom_call.1} parent=135 // pred_check_branch
                %809 = sbr.rel target = $region162
              $region161: #{tpu_custom_call.1} parent=135 // pred_region
                _
              $region162: #{tpu_custom_call.1} parent=135 // pred_fallthru
                _
            $region136: #{tpu_custom_call.1} parent=131 // pred_fallthru
              _
            // Predicated region
            $region137: #{tpu_custom_call.1} parent=131 // pred_check
              _
            $region138: #{tpu_custom_call.1} parent=131 // pred_check_branch
              %756 = sbr.rel target = $region140
            $region139: #{tpu_custom_call.1} parent=131 // pred_region
              loop: start=0, step=1, limit=1
              $region141: #{tpu_custom_call.1} parent=139 // loop_pre_header
                _
              $region142: #{tpu_custom_call.1} parent=139 // loop_header
                %s759 = sphi 0, %s763
                %p760 = scmp.ge.s32.totalorder %s759, 1
                %s764 = sphi %s750, %s750
                %s765 = sphi %s748, %s748
              $region143: #{tpu_custom_call.1} parent=139 // loop_header_branch
                %762 = sbr.rel (%p760) target = $region147
              $region144: #{tpu_custom_call.1} parent=139 // loop_body
                %v766 = vld [vmem:[%s764] sm:$0xff]
                %767 = vst [vmem:[%s765] sm:$0xff] %v766
                %v768 = vld [vmem:[%s764 + $0x10] sm:$0xff]
                %769 = vst [vmem:[%s765 + $0x8] sm:$0xff] %v768
                %v770 = vld [vmem:[%s764 + $0x20] sm:$0xff]
                %771 = vst [vmem:[%s765 + $0x10] sm:$0xff] %v770
                %v772 = vld [vmem:[%s764 + $0x30] sm:$0xff]
                %773 = vst [vmem:[%s765 + $0x18] sm:$0xff] %v772
                %v774 = vld [vmem:[%s764 + $0x40] sm:$0xff]
                %775 = vst [vmem:[%s765 + $0x20] sm:$0xff] %v774
                %v776 = vld [vmem:[%s764 + $0x50] sm:$0xff]
                %777 = vst [vmem:[%s765 + $0x28] sm:$0xff] %v776
                %v778 = vld [vmem:[%s764 + $0x60] sm:$0xff]
                %779 = vst [vmem:[%s765 + $0x30] sm:$0xff] %v778
                %v780 = vld [vmem:[%s764 + $0x70] sm:$0xff]
                %781 = vst [vmem:[%s765 + $0x38] sm:$0xff] %v780
              $region145: #{tpu_custom_call.1} parent=139 // loop_footer
                %s763 = sadd.s32 1, %s759
              $region146: #{tpu_custom_call.1} parent=139 // loop_footer_branch
                %758 = sbr.rel target = $region142
              $region147: #{tpu_custom_call.1} parent=139 // loop_exit
                _
            $region140: #{tpu_custom_call.1} parent=131 // pred_fallthru
              _
          $region132: #{tpu_custom_call.1} parent=127 // pred_fallthru
            _
          %810 = vnop
        $region128: #{tpu_custom_call.1} parent=43 // pred_fallthru
          _
      $region44: #{tpu_custom_call.1} parent=5 // pred_fallthru
        _
      %p811 = scmp.le.s32.totalorder 1, %s20
      %p812 = scmp.lt.s32.totalorder %s20, 3
      %p813 = pnand %p811, %p812
      %p814 = pneg %p813
      // Predicated region
      $region163: #{tpu_custom_call.1} parent=5 // pred_check
        _
      $region164: #{tpu_custom_call.1} parent=5 // pred_check_branch
        %816 = sbr.rel (%p813) target = $region166
      $region165: #{tpu_custom_call.1} parent=5 // pred_region
        %s817 = ssub.s32 %s20, 1
        %s818 = sand.u32 %s33, 1
        %s819 = sand.u32 %s33, 1
        %s820 = smul.addr %s819, 72
        %s821 = scalar_lea.vmem [#allocation2], %s820
        // Predicated region
        $region167: #{tpu_custom_call.1} parent=165 // pred_check
          %p822 = pneg %p46
        $region168: #{tpu_custom_call.1} parent=165 // pred_check_branch
          %824 = sbr.rel (%p822) target = $region170
        $region169: #{tpu_custom_call.1} parent=165 // pred_region
          _
        $region170: #{tpu_custom_call.1} parent=165 // pred_fallthru
          _
        %s825 = sand.u32 %s59, 1
        %s826 = sand.u32 %s59, 1
        %s827 = smul.addr %s826, 576
        %s828 = scalar_lea.vmem [#allocation3], %s827
        // Predicated region
        $region171: #{tpu_custom_call.1} parent=165 // pred_check
          %p829 = pneg %p72
        $region172: #{tpu_custom_call.1} parent=165 // pred_check_branch
          %831 = sbr.rel (%p829) target = $region174
        $region173: #{tpu_custom_call.1} parent=165 // pred_region
          _
        $region174: #{tpu_custom_call.1} parent=165 // pred_fallthru
          _
        %s832 = sand.u32 %s111, 1
        %s833 = sand.u32 %s111, 1
        %s834 = smul.addr %s833, 64
        %s835 = scalar_lea.vmem [#allocation4], %s834
        // Predicated region
        $region175: #{tpu_custom_call.1} parent=165 // pred_check
          %p836 = pneg %p124
        $region176: #{tpu_custom_call.1} parent=165 // pred_check_branch
          %838 = sbr.rel (%p836) target = $region178
        $region177: #{tpu_custom_call.1} parent=165 // pred_region
          _
        $region178: #{tpu_custom_call.1} parent=165 // pred_fallthru
          _
        %s839 = sand.u32 %s33, 1
        %s840 = sand.u32 %s33, 1
        %s841 = smul.addr %s840, 72
        %s842 = scalar_lea.vmem [#allocation2], %s841
        %p843 = pneg %p46
        %p844 = pneg %p43
        %s845 = sand.u32 %s59, 1
        %s846 = sand.u32 %s59, 1
        %s847 = smul.addr %s846, 576
        %s848 = scalar_lea.vmem [#allocation3], %s847
        %p849 = pneg %p72
        %p850 = pneg %p69
        %p851 = scmp.lt.s32.totalorder %s25, 1
        %s852 = scalar_select %p851, %s25, 1
        %s853 = smul.addr %s852, 8
        %s854 = scalar_lea.vmem %s2, %s853
        %p855 = pneg %p98
        %p856 = pneg %p95
        %s857 = sand.u32 %s111, 1
        %s858 = sand.u32 %s111, 1
        %s859 = smul.addr %s858, 64
        %s860 = scalar_lea.vmem [#allocation4], %s859
        %p861 = pneg %p124
        %p862 = pneg %p121
        %p863 = pneg %p145
        %p864 = pneg %p142
        %p865 = pneg %p166
        %p866 = pneg %p163
        %p867 = pneg %p187
        %p868 = pneg %p184
        %p869 = pneg %p208
        %p870 = pneg %p205
        %p871 = pneg %p229
        %p872 = pneg %p226
        %p873 = pneg %p250
        %p874 = pneg %p247
        %p875 = pneg %p271
        %p876 = pneg %p268
        %p877 = pneg %p297
        %p878 = pneg %p294
        %s879 = sand.u32 %s284, 1
        %s880 = scalar_lea.sflag [#allocation6], %s879
        %s881 = sand.u32 %s284, 1
        %s882 = smul.addr %s881, 8
        %s883 = scalar_lea.vmem [#allocation5], %s882
        %p884 = scmp.lt.s32.totalorder %s25, 1
        %s885 = scalar_select %p884, %s25, 1
        %s886 = smul.addr %s885, 8
        %s887 = scalar_lea.vmem %s2, %s886
        %v888 = vld [vmem:[%s10] sm:$0x1]
        %v889 = vld [vmem:[%s887] sm:$0xff]
        %v891 = vlaneseq
        %v892 = vshrl.u32 %v891, 7
        %v893 = vsub.s32 0, %v892
        %v894 = vrot.slane %v888, %v893
        %v896 = vmul.f32 %v894, %v889
        %vm897 = vcmask 64512
        %v898 = vsel %vm897, %v896, -inf
        %899 = vmax.xlane.f32.xlu0 %v898
        %v900 = vpop.xlane.xlu0 %899
        %v901 = vsub.f32 %v896, %v900
        %v902 = vmul.f32 %v901, 1.442695
        %v903 = vpow.pop %v902
        %v904 = vsel %vm897, %v903, 0.0
        %905 = vadd.xlane.f32.xlu0 %v904
        %v906 = vpop.xlane.xlu0 %905
        %v907 = vrcp.pop %v906
        %v908 = vmul.f32 %v906, %v907
        %v909 = vsub.f32 2.0, %v908
        %v910 = vmul.f32 %v907, %v909
        %v911 = vmul.f32 %v903, %v910
        %v912 = vld [vmem:[%s835] sm:$0xff]
        %v913 = vld [vmem:[%s835 + $0x8] sm:$0xff]
        %v914 = vld [vmem:[%s835 + $0x10] sm:$0xff]
        %v915 = vld [vmem:[%s835 + $0x18] sm:$0xff]
        %v916 = vld [vmem:[%s835 + $0x20] sm:$0xff]
        %v917 = vld [vmem:[%s835 + $0x28] sm:$0xff]
        %v918 = vld [vmem:[%s835 + $0x30] sm:$0xff]
        %v919 = vld [vmem:[%s835 + $0x38] sm:$0xff]
        %v920 = vmul.f32 %v894, %v912
        %v921 = vmul.f32 %v894, %v913
        %v922 = vmul.f32 %v894, %v914
        %v923 = vmul.f32 %v894, %v915
        %v924 = vmul.f32 %v894, %v916
        %v925 = vmul.f32 %v894, %v917
        %v926 = vmul.f32 %v894, %v918
        %v927 = vmul.f32 %v894, %v919
        %v928 = vsel %vm897, %v920, -inf
        %929 = vmax.xlane.f32.xlu0 %v928
        %v930 = vpop.xlane.xlu0 %929
        %v931 = vsel %vm897, %v921, -inf
        %932 = vmax.xlane.f32.xlu0 %v931
        %v933 = vpop.xlane.xlu0 %932
        %v934 = vsel %vm897, %v922, -inf
        %935 = vmax.xlane.f32.xlu0 %v934
        %v936 = vpop.xlane.xlu0 %935
        %v937 = vsel %vm897, %v923, -inf
        %938 = vmax.xlane.f32.xlu0 %v937
        %v939 = vpop.xlane.xlu0 %938
        %v940 = vsel %vm897, %v924, -inf
        %941 = vmax.xlane.f32.xlu0 %v940
        %v942 = vpop.xlane.xlu0 %941
        %v943 = vsel %vm897, %v925, -inf
        %944 = vmax.xlane.f32.xlu0 %v943
        %v945 = vpop.xlane.xlu0 %944
        %v946 = vsel %vm897, %v926, -inf
        %947 = vmax.xlane.f32.xlu0 %v946
        %v948 = vpop.xlane.xlu0 %947
        %v949 = vsel %vm897, %v927, -inf
        %950 = vmax.xlane.f32.xlu0 %v949
        %v951 = vpop.xlane.xlu0 %950
        %v952 = vsub.f32 %v920, %v930
        %v953 = vsub.f32 %v921, %v933
        %v954 = vsub.f32 %v922, %v936
        %v955 = vsub.f32 %v923, %v939
        %v956 = vsub.f32 %v924, %v942
        %v957 = vsub.f32 %v925, %v945
        %v958 = vsub.f32 %v926, %v948
        %v959 = vsub.f32 %v927, %v951
        %v960 = vmul.f32 %v952, 1.442695
        %v961 = vpow.pop %v960
        %v962 = vmul.f32 %v953, 1.442695
        %v963 = vpow.pop %v962
        %v964 = vmul.f32 %v954, 1.442695
        %v965 = vpow.pop %v964
        %v966 = vmul.f32 %v955, 1.442695
        %v967 = vpow.pop %v966
        %v968 = vmul.f32 %v956, 1.442695
        %v969 = vpow.pop %v968
        %v970 = vmul.f32 %v957, 1.442695
        %v971 = vpow.pop %v970
        %v972 = vmul.f32 %v958, 1.442695
        %v973 = vpow.pop %v972
        %v974 = vmul.f32 %v959, 1.442695
        %v975 = vpow.pop %v974
        %v976 = vsel %vm897, %v961, 0.0
        %977 = vadd.xlane.f32.xlu0 %v976
        %v978 = vpop.xlane.xlu0 %977
        %v979 = vsel %vm897, %v963, 0.0
        %980 = vadd.xlane.f32.xlu0 %v979
        %v981 = vpop.xlane.xlu0 %980
        %v982 = vsel %vm897, %v965, 0.0
        %983 = vadd.xlane.f32.xlu0 %v982
        %v984 = vpop.xlane.xlu0 %983
        %v985 = vsel %vm897, %v967, 0.0
        %986 = vadd.xlane.f32.xlu0 %v985
        %v987 = vpop.xlane.xlu0 %986
        %v988 = vsel %vm897, %v969, 0.0
        %989 = vadd.xlane.f32.xlu0 %v988
        %v990 = vpop.xlane.xlu0 %989
        %v991 = vsel %vm897, %v971, 0.0
        %992 = vadd.xlane.f32.xlu0 %v991
        %v993 = vpop.xlane.xlu0 %992
        %v994 = vsel %vm897, %v973, 0.0
        %995 = vadd.xlane.f32.xlu0 %v994
        %v996 = vpop.xlane.xlu0 %995
        %v997 = vsel %vm897, %v975, 0.0
        %998 = vadd.xlane.f32.xlu0 %v997
        %v999 = vpop.xlane.xlu0 %998
        %v1000 = vrcp.pop %v978
        %v1001 = vrcp.pop %v981
        %v1002 = vrcp.pop %v984
        %v1003 = vrcp.pop %v987
        %v1004 = vrcp.pop %v990
        %v1005 = vrcp.pop %v993
        %v1006 = vrcp.pop %v996
        %v1007 = vrcp.pop %v999
        %v1008 = vmul.f32 %v978, %v1000
        %v1009 = vmul.f32 %v981, %v1001
        %v1010 = vmul.f32 %v984, %v1002
        %v1011 = vmul.f32 %v987, %v1003
        %v1012 = vmul.f32 %v990, %v1004
        %v1013 = vmul.f32 %v993, %v1005
        %v1014 = vmul.f32 %v996, %v1006
        %v1015 = vmul.f32 %v999, %v1007
        %v1016 = vsub.f32 2.0, %v1008
        %v1017 = vsub.f32 2.0, %v1009
        %v1018 = vsub.f32 2.0, %v1010
        %v1019 = vsub.f32 2.0, %v1011
        %v1020 = vsub.f32 2.0, %v1012
        %v1021 = vsub.f32 2.0, %v1013
        %v1022 = vsub.f32 2.0, %v1014
        %v1023 = vsub.f32 2.0, %v1015
        %v1024 = vmul.f32 %v1000, %v1016
        %v1025 = vmul.f32 %v1001, %v1017
        %v1026 = vmul.f32 %v1002, %v1018
        %v1027 = vmul.f32 %v1003, %v1019
        %v1028 = vmul.f32 %v1004, %v1020
        %v1029 = vmul.f32 %v1005, %v1021
        %v1030 = vmul.f32 %v1006, %v1022
        %v1031 = vmul.f32 %v1007, %v1023
        %v1032 = vmul.f32 %v961, %v1024
        %v1033 = vmul.f32 %v963, %v1025
        %v1034 = vmul.f32 %v965, %v1026
        %v1035 = vmul.f32 %v967, %v1027
        %v1036 = vmul.f32 %v969, %v1028
        %v1037 = vmul.f32 %v971, %v1029
        %v1038 = vmul.f32 %v973, %v1030
        %v1039 = vmul.f32 %v975, %v1031
        %v1040 = vld [vmem:[%s821] sm:$0xff]
        %v1041 = vld [vmem:[%s821 + $0x8] sm:$0xff]
        %v1042 = vld [vmem:[%s821 + $0x10] sm:$0xff]
        %v1043 = vld [vmem:[%s821 + $0x18] sm:$0xff]
        %v1044 = vld [vmem:[%s821 + $0x20] sm:$0xff]
        %v1045 = vld [vmem:[%s821 + $0x28] sm:$0xff]
        %v1046 = vld [vmem:[%s821 + $0x30] sm:$0xff]
        %v1047 = vld [vmem:[%s821 + $0x38] sm:$0xff]
        %v1048 = vld [vmem:[%s821 + $0x40] sm:$0xff]
        %v1049 = vld [vmem:[%s828] sm:$0xff]
        %v1050 = vld [vmem:[%s828 + $0x8] sm:$0xff]
        %v1051 = vld [vmem:[%s828 + $0x10] sm:$0xff]
        %v1052 = vld [vmem:[%s828 + $0x18] sm:$0xff]
        %v1053 = vld [vmem:[%s828 + $0x20] sm:$0xff]
        %v1054 = vld [vmem:[%s828 + $0x28] sm:$0xff]
        %v1055 = vld [vmem:[%s828 + $0x30] sm:$0xff]
        %v1056 = vld [vmem:[%s828 + $0x38] sm:$0xff]
        %v1057 = vld [vmem:[%s828 + $0x40] sm:$0xff]
        %v1058 = vld [vmem:[%s828 + $0x48] sm:$0xff]
        %v1059 = vld [vmem:[%s828 + $0x50] sm:$0xff]
        %v1060 = vld [vmem:[%s828 + $0x58] sm:$0xff]
        %v1061 = vld [vmem:[%s828 + $0x60] sm:$0xff]
        %v1062 = vld [vmem:[%s828 + $0x68] sm:$0xff]
        %v1063 = vld [vmem:[%s828 + $0x70] sm:$0xff]
        %v1064 = vld [vmem:[%s828 + $0x78] sm:$0xff]
        %v1065 = vld [vmem:[%s828 + $0x80] sm:$0xff]
        %v1066 = vld [vmem:[%s828 + $0x88] sm:$0xff]
        %v1067 = vld [vmem:[%s828 + $0x90] sm:$0xff]
        %v1068 = vld [vmem:[%s828 + $0x98] sm:$0xff]
        %v1069 = vld [vmem:[%s828 + $0xa0] sm:$0xff]
        %v1070 = vld [vmem:[%s828 + $0xa8] sm:$0xff]
        %v1071 = vld [vmem:[%s828 + $0xb0] sm:$0xff]
        %v1072 = vld [vmem:[%s828 + $0xb8] sm:$0xff]
        %v1073 = vld [vmem:[%s828 + $0xc0] sm:$0xff]
        %v1074 = vld [vmem:[%s828 + $0xc8] sm:$0xff]
        %v1075 = vld [vmem:[%s828 + $0xd0] sm:$0xff]
        %v1076 = vld [vmem:[%s828 + $0xd8] sm:$0xff]
        %v1077 = vld [vmem:[%s828 + $0xe0] sm:$0xff]
        %v1078 = vld [vmem:[%s828 + $0xe8] sm:$0xff]
        %v1079 = vld [vmem:[%s828 + $0xf0] sm:$0xff]
        %v1080 = vld [vmem:[%s828 + $0xf8] sm:$0xff]
        %v1081 = vld [vmem:[%s828 + $0x100] sm:$0xff]
        %v1082 = vld [vmem:[%s828 + $0x108] sm:$0xff]
        %v1083 = vld [vmem:[%s828 + $0x110] sm:$0xff]
        %v1084 = vld [vmem:[%s828 + $0x118] sm:$0xff]
        %v1085 = vld [vmem:[%s828 + $0x120] sm:$0xff]
        %v1086 = vld [vmem:[%s828 + $0x128] sm:$0xff]
        %v1087 = vld [vmem:[%s828 + $0x130] sm:$0xff]
        %v1088 = vld [vmem:[%s828 + $0x138] sm:$0xff]
        %v1089 = vld [vmem:[%s828 + $0x140] sm:$0xff]
        %v1090 = vld [vmem:[%s828 + $0x148] sm:$0xff]
        %v1091 = vld [vmem:[%s828 + $0x150] sm:$0xff]
        %v1092 = vld [vmem:[%s828 + $0x158] sm:$0xff]
        %v1093 = vld [vmem:[%s828 + $0x160] sm:$0xff]
        %v1094 = vld [vmem:[%s828 + $0x168] sm:$0xff]
        %v1095 = vld [vmem:[%s828 + $0x170] sm:$0xff]
        %v1096 = vld [vmem:[%s828 + $0x178] sm:$0xff]
        %v1097 = vld [vmem:[%s828 + $0x180] sm:$0xff]
        %v1098 = vld [vmem:[%s828 + $0x188] sm:$0xff]
        %v1099 = vld [vmem:[%s828 + $0x190] sm:$0xff]
        %v1100 = vld [vmem:[%s828 + $0x198] sm:$0xff]
        %v1101 = vld [vmem:[%s828 + $0x1a0] sm:$0xff]
        %v1102 = vld [vmem:[%s828 + $0x1a8] sm:$0xff]
        %v1103 = vld [vmem:[%s828 + $0x1b0] sm:$0xff]
        %v1104 = vld [vmem:[%s828 + $0x1b8] sm:$0xff]
        %v1105 = vld [vmem:[%s828 + $0x1c0] sm:$0xff]
        %v1106 = vld [vmem:[%s828 + $0x1c8] sm:$0xff]
        %v1107 = vld [vmem:[%s828 + $0x1d0] sm:$0xff]
        %v1108 = vld [vmem:[%s828 + $0x1d8] sm:$0xff]
        %v1109 = vld [vmem:[%s828 + $0x1e0] sm:$0xff]
        %v1110 = vld [vmem:[%s828 + $0x1e8] sm:$0xff]
        %v1111 = vld [vmem:[%s828 + $0x1f0] sm:$0xff]
        %v1112 = vld [vmem:[%s828 + $0x1f8] sm:$0xff]
        %v1113 = vld [vmem:[%s828 + $0x200] sm:$0xff]
        %v1114 = vld [vmem:[%s828 + $0x208] sm:$0xff]
        %v1115 = vld [vmem:[%s828 + $0x210] sm:$0xff]
        %v1116 = vld [vmem:[%s828 + $0x218] sm:$0xff]
        %v1117 = vld [vmem:[%s828 + $0x220] sm:$0xff]
        %v1118 = vld [vmem:[%s828 + $0x228] sm:$0xff]
        %v1119 = vld [vmem:[%s828 + $0x230] sm:$0xff]
        %v1120 = vld [vmem:[%s828 + $0x238] sm:$0xff]
        %v1121 = vld [vmem:[%s4] sm:$0xff]
        %v1122 = vld [vmem:[%s4 + $0x8] sm:$0xff]
        %v1123 = vld [vmem:[%s5] sm:$0x1]
        %v1125 = vlaneseq
        %v1126 = vshrl.u32 %v1125, 7
        %v1127 = vsub.s32 0, %v1126
        %v1128 = vrot.slane %v1123, %v1127
        %vm1130 = vcmask 130048
        %v1132 = vsel %vm1130, %v1040, 0
        %v1135 = vsel %vm1130, %v1041, 0
        %v1138 = vsel %vm1130, %v1042, 0
        %v1141 = vsel %vm1130, %v1043, 0
        %v1144 = vsel %vm1130, %v1044, 0
        %v1147 = vsel %vm1130, %v1045, 0
        %v1150 = vsel %vm1130, %v1046, 0
        %v1153 = vsel %vm1130, %v1047, 0
        %v1156 = vsel %vm1130, %v1048, 0
        %1158 = vmatprep.subr.mxu0 0.0
        %1159 = vmatpush1.msra.mxu0 %v1121
        %1160 = vmatprep.subr.mxu0 0.0
        %1161 = vmatpush1.msra.mxu0 %v1122
        %1162 = vmatprep.subr.mxu0 0.0
        %1163 = vmatpush1.msra.mxu0 0.0
        %1164 = vmatprep.subr.mxu0 0.0
        %1165 = vmatpush1.msra.mxu0 0.0
        %1166 = vmatprep.subr.mxu0 0.0
        %1167 = vmatpush1.msra.mxu0 0.0
        %1168 = vmatprep.subr.mxu0 0.0
        %1169 = vmatpush1.msra.mxu0 0.0
        %1170 = vmatprep.subr.mxu0 0.0
        %1171 = vmatpush1.msra.mxu0 0.0
        %1172 = vmatprep.subr.mxu0 0.0
        %1173 = vmatpush1.msra.mxu0 0.0
        %1174 = vmatprep.subr.mxu0 0.0
        %1175 = vmatpush1.msra.mxu0 0.0
        %1176 = vmatprep.subr.mxu0 0.0
        %1177 = vmatpush1.msra.mxu0 0.0
        %1178 = vmatprep.subr.mxu0 0.0
        %1179 = vmatpush1.msra.mxu0 0.0
        %1180 = vmatprep.subr.mxu0 0.0
        %1181 = vmatpush1.msra.mxu0 0.0
        %1182 = vmatprep.subr.mxu0 0.0
        %1183 = vmatpush1.msra.mxu0 0.0
        %1184 = vmatprep.subr.mxu0 0.0
        %1185 = vmatpush1.msra.mxu0 0.0
        %1186 = vmatprep.subr.mxu0 0.0
        %1187 = vmatpush1.msra.mxu0 0.0
        %1188 = vmatprep.subr.mxu0 0.0
        %1189 = vmatpush1.msra.mxu0 0.0
        %1190 = vmatprep.subr.mxu0 0.0
        %1191 = vmatpush1.msra.mxu0 0.0
        %1192 = vmatprep.subr.mxu0 0.0
        %1193 = vmatpush1.msra.mxu0 0.0
        %1194 = vmatprep.subr.mxu0 0.0
        %1195 = vmatpush1.msra.mxu0 0.0
        %1196 = vmatprep.subr.mxu0 0.0
        %1197 = vmatpush1.msra.mxu0 0.0
        %1198 = vmatprep.subr.mxu0 0.0
        %1199 = vmatpush1.msra.mxu0 0.0
        %1200 = vmatprep.subr.mxu0 0.0
        %1201 = vmatpush1.msra.mxu0 0.0
        %1202 = vmatprep.subr.mxu0 0.0
        %1203 = vmatpush1.msra.mxu0 0.0
        %1204 = vmatprep.subr.mxu0 0.0
        %1205 = vmatpush1.msra.mxu0 0.0
        %1206 = vmatprep.subr.mxu0 0.0
        %1207 = vmatpush1.msra.mxu0 0.0
        %1208 = vmatprep.subr.mxu0 0.0
        %1209 = vmatpush1.msra.mxu0 0.0
        %1210 = vmatprep.subr.mxu0 0.0
        %1211 = vmatpush1.msra.mxu0 0.0
        %1212 = vmatprep.subr.mxu0 0.0
        %1213 = vmatpush1.msra.mxu0 0.0
        %1214 = vmatprep.subr.mxu0 0.0
        %1215 = vmatpush1.msra.mxu0 0.0
        %1216 = vmatprep.subr.mxu0 0.0
        %1217 = vmatpush1.msra.mxu0 0.0
        %1218 = vmatprep.subr.mxu0 0.0
        %1219 = vmatpush1.msra.mxu0 0.0
        %1220 = vmatprep.subr.mxu0 0.0
        %1221 = vmatpush1.msra.mxu0 0.0
        %1222 = vmatprep.mubr.f32.mxu0 0.0
        %1223 = vmatmul.mubr.f32.gmra.mrb[0].mxu0 %v1132
        %v1224 = vpop.f32.mrb[0].mxu0
        %v1225 = vadd.f32 %v1128, %v1224
        %v1226 = vpop.f32.mrb[0].mxu0
        %1227 = vmatprep.mubr.f32.mxu0 0.0
        %1228 = vmatmul.mubr.f32.gmra.mrb[0].mxu0 %v1135
        %v1229 = vpop.f32.mrb[0].mxu0
        %v1230 = vadd.f32 %v1128, %v1229
        %v1231 = vpop.f32.mrb[0].mxu0
        %1232 = vmatprep.mubr.f32.mxu0 0.0
        %1233 = vmatmul.mubr.f32.gmra.mrb[0].mxu0 %v1138
        %v1234 = vpop.f32.mrb[0].mxu0
        %v1235 = vadd.f32 %v1128, %v1234
        %v1236 = vpop.f32.mrb[0].mxu0
        %1237 = vmatprep.mubr.f32.mxu0 0.0
        %1238 = vmatmul.mubr.f32.gmra.mrb[0].mxu0 %v1141
        %v1239 = vpop.f32.mrb[0].mxu0
        %v1240 = vadd.f32 %v1128, %v1239
        %v1241 = vpop.f32.mrb[0].mxu0
        %1242 = vmatprep.mubr.f32.mxu0 0.0
        %1243 = vmatmul.mubr.f32.gmra.mrb[0].mxu0 %v1144
        %v1244 = vpop.f32.mrb[0].mxu0
        %v1245 = vadd.f32 %v1128, %v1244
        %v1246 = vpop.f32.mrb[0].mxu0
        %1247 = vmatprep.mubr.f32.mxu0 0.0
        %1248 = vmatmul.mubr.f32.gmra.mrb[0].mxu0 %v1147
        %v1249 = vpop.f32.mrb[0].mxu0
        %v1250 = vadd.f32 %v1128, %v1249
        %v1251 = vpop.f32.mrb[0].mxu0
        %1252 = vmatprep.mubr.f32.mxu0 0.0
        %1253 = vmatmul.mubr.f32.gmra.mrb[0].mxu0 %v1150
        %v1254 = vpop.f32.mrb[0].mxu0
        %v1255 = vadd.f32 %v1128, %v1254
        %v1256 = vpop.f32.mrb[0].mxu0
        %1257 = vmatprep.mubr.f32.mxu0 0.0
        %1258 = vmatmul.mubr.f32.gmra.mrb[0].mxu0 %v1153
        %v1259 = vpop.f32.mrb[0].mxu0
        %v1260 = vadd.f32 %v1128, %v1259
        %v1261 = vpop.f32.mrb[0].mxu0
        %1262 = vmatprep.mubr.f32.mxu0 0.0
        %1263 = vmatmul.mubr.f32.gmra.mrb[0].mxu0 %v1156
        %v1264 = vpop.f32.mrb[0].mxu0
        %v1265 = vadd.f32 %v1128, %v1264
        %v1266 = vpop.f32.mrb[0].mxu0
        %1267 = vdwg.mxu0
        %v1268 = vld [vmem:[%s6] sm:$0xff]
        %v1269 = vld [vmem:[%s6 + $0x8] sm:$0xff]
        %v1270 = vld [vmem:[%s7] sm:$0x1]
        %v1272 = vlaneseq
        %v1273 = vshrl.u32 %v1272, 7
        %v1274 = vsub.s32 0, %v1273
        %v1275 = vrot.slane %v1270, %v1274
        %v1278 = vsel %vm1130, %v1049, 0
        %v1281 = vsel %vm1130, %v1050, 0
        %v1284 = vsel %vm1130, %v1051, 0
        %v1287 = vsel %vm1130, %v1052, 0
        %v1290 = vsel %vm1130, %v1053, 0
        %v1293 = vsel %vm1130, %v1054, 0
        %v1296 = vsel %vm1130, %v1055, 0
        %v1299 = vsel %vm1130, %v1056, 0
        %v1302 = vsel %vm1130, %v1057, 0
        %v1305 = vsel %vm1130, %v1058, 0
        %v1308 = vsel %vm1130, %v1059, 0
        %v1311 = vsel %vm1130, %v1060, 0
        %v1314 = vsel %vm1130, %v1061, 0
        %v1317 = vsel %vm1130, %v1062, 0
        %v1320 = vsel %vm1130, %v1063, 0
        %v1323 = vsel %vm1130, %v1064, 0
        %v1326 = vsel %vm1130, %v1065, 0
        %v1329 = vsel %vm1130, %v1066, 0
        %v1332 = vsel %vm1130, %v1067, 0
        %v1335 = vsel %vm1130, %v1068, 0
        %v1338 = vsel %vm1130, %v1069, 0
        %v1341 = vsel %vm1130, %v1070, 0
        %v1344 = vsel %vm1130, %v1071, 0
        %v1347 = vsel %vm1130, %v1072, 0
        %v1350 = vsel %vm1130, %v1073, 0
        %v1353 = vsel %vm1130, %v1074, 0
        %v1356 = vsel %vm1130, %v1075, 0
        %v1359 = vsel %vm1130, %v1076, 0
        %v1362 = vsel %vm1130, %v1077, 0
        %v1365 = vsel %vm1130, %v1078, 0
        %v1368 = vsel %vm1130, %v1079, 0
        %v1371 = vsel %vm1130, %v1080, 0
        %v1374 = vsel %vm1130, %v1081, 0
        %v1377 = vsel %vm1130, %v1082, 0
        %v1380 = vsel %vm1130, %v1083, 0
        %v1383 = vsel %vm1130, %v1084, 0
        %v1386 = vsel %vm1130, %v1085, 0
        %v1389 = vsel %vm1130, %v1086, 0
        %v1392 = vsel %vm1130, %v1087, 0
        %v1395 = vsel %vm1130, %v1088, 0
        %v1398 = vsel %vm1130, %v1089, 0
        %v1401 = vsel %vm1130, %v1090, 0
        %v1404 = vsel %vm1130, %v1091, 0
        %v1407 = vsel %vm1130, %v1092, 0
        %v1410 = vsel %vm1130, %v1093, 0
        %v1413 = vsel %vm1130, %v1094, 0
        %v1416 = vsel %vm1130, %v1095, 0
        %v1419 = vsel %vm1130, %v1096, 0
        %v1422 = vsel %vm1130, %v1097, 0
        %v1425 = vsel %vm1130, %v1098, 0
        %v1428 = vsel %vm1130, %v1099, 0
        %v1431 = vsel %vm1130, %v1100, 0
        %v1434 = vsel %vm1130, %v1101, 0
        %v1437 = vsel %vm1130, %v1102, 0
        %v1440 = vsel %vm1130, %v1103, 0
        %v1443 = vsel %vm1130, %v1104, 0
        %v1446 = vsel %vm1130, %v1105, 0
        %v1449 = vsel %vm1130, %v1106, 0
        %v1452 = vsel %vm1130, %v1107, 0
        %v1455 = vsel %vm1130, %v1108, 0
        %v1458 = vsel %vm1130, %v1109, 0
        %v1461 = vsel %vm1130, %v1110, 0
        %v1464 = vsel %vm1130, %v1111, 0
        %v1467 = vsel %vm1130, %v1112, 0
        %v1470 = vsel %vm1130, %v1113, 0
        %v1473 = vsel %vm1130, %v1114, 0
        %v1476 = vsel %vm1130, %v1115, 0
        %v1479 = vsel %vm1130, %v1116, 0
        %v1482 = vsel %vm1130, %v1117, 0
        %v1485 = vsel %vm1130, %v1118, 0
        %v1488 = vsel %vm1130, %v1119, 0
        %v1491 = vsel %vm1130, %v1120, 0
        %1493 = vmatprep.subr.mxu0 0.0
        %1494 = vmatpush1.msra.mxu0 %v1268
        %1495 = vmatprep.subr.mxu0 0.0
        %1496 = vmatpush1.msra.mxu0 %v1269
        %1497 = vmatprep.subr.mxu0 0.0
        %1498 = vmatpush1.msra.mxu0 0.0
        %1499 = vmatprep.subr.mxu0 0.0
        %1500 = vmatpush1.msra.mxu0 0.0
        %1501 = vmatprep.subr.mxu0 0.0
        %1502 = vmatpush1.msra.mxu0 0.0
        %1503 = vmatprep.subr.mxu0 0.0
        %1504 = vmatpush1.msra.mxu0 0.0
        %1505 = vmatprep.subr.mxu0 0.0
        %1506 = vmatpush1.msra.mxu0 0.0
        %1507 = vmatprep.subr.mxu0 0.0
        %1508 = vmatpush1.msra.mxu0 0.0
        %1509 = vmatprep.subr.mxu0 0.0
        %1510 = vmatpush1.msra.mxu0 0.0
        %1511 = vmatprep.subr.mxu0 0.0
        %1512 = vmatpush1.msra.mxu0 0.0
        %1513 = vmatprep.subr.mxu0 0.0
        %1514 = vmatpush1.msra.mxu0 0.0
        %1515 = vmatprep.subr.mxu0 0.0
        %1516 = vmatpush1.msra.mxu0 0.0
        %1517 = vmatprep.subr.mxu0 0.0
        %1518 = vmatpush1.msra.mxu0 0.0
        %1519 = vmatprep.subr.mxu0 0.0
        %1520 = vmatpush1.msra.mxu0 0.0
        %1521 = vmatprep.subr.mxu0 0.0
        %1522 = vmatpush1.msra.mxu0 0.0
        %1523 = vmatprep.subr.mxu0 0.0
        %1524 = vmatpush1.msra.mxu0 0.0
        %1525 = vmatprep.subr.mxu0 0.0
        %1526 = vmatpush1.msra.mxu0 0.0
        %1527 = vmatprep.subr.mxu0 0.0
        %1528 = vmatpush1.msra.mxu0 0.0
        %1529 = vmatprep.subr.mxu0 0.0
        %1530 = vmatpush1.msra.mxu0 0.0
        %1531 = vmatprep.subr.mxu0 0.0
        %1532 = vmatpush1.msra.mxu0 0.0
        %1533 = vmatprep.subr.mxu0 0.0
        %1534 = vmatpush1.msra.mxu0 0.0
        %1535 = vmatprep.subr.mxu0 0.0
        %1536 = vmatpush1.msra.mxu0 0.0
        %1537 = vmatprep.subr.mxu0 0.0
        %1538 = vmatpush1.msra.mxu0 0.0
        %1539 = vmatprep.subr.mxu0 0.0
        %1540 = vmatpush1.msra.mxu0 0.0
        %1541 = vmatprep.subr.mxu0 0.0
        %1542 = vmatpush1.msra.mxu0 0.0
        %1543 = vmatprep.subr.mxu0 0.0
        %1544 = vmatpush1.msra.mxu0 0.0
        %1545 = vmatprep.subr.mxu0 0.0
        %1546 = vmatpush1.msra.mxu0 0.0
        %1547 = vmatprep.subr.mxu0 0.0
        %1548 = vmatpush1.msra.mxu0 0.0
        %1549 = vmatprep.subr.mxu0 0.0
        %1550 = vmatpush1.msra.mxu0 0.0
        %1551 = vmatprep.subr.mxu0 0.0
        %1552 = vmatpush1.msra.mxu0 0.0
        %1553 = vmatprep.subr.mxu0 0.0
        %1554 = vmatpush1.msra.mxu0 0.0
        %1555 = vmatprep.subr.mxu0 0.0
        %1556 = vmatpush1.msra.mxu0 0.0
        %1557 = vmatprep.mubr.f32.mxu0 0.0
        %1558 = vmatmul.mubr.f32.gmra.mrb[0].mxu0 %v1278
        %v1559 = vpop.f32.mrb[0].mxu0
        %v1560 = vadd.f32 %v1275, %v1559
        %v1561 = vpop.f32.mrb[0].mxu0
        %1562 = vmatprep.mubr.f32.mxu0 0.0
        %1563 = vmatmul.mubr.f32.gmra.mrb[0].mxu0 %v1281
        %v1564 = vpop.f32.mrb[0].mxu0
        %v1565 = vadd.f32 %v1275, %v1564
        %v1566 = vpop.f32.mrb[0].mxu0
        %1567 = vmatprep.mubr.f32.mxu0 0.0
        %1568 = vmatmul.mubr.f32.gmra.mrb[0].mxu0 %v1284
        %v1569 = vpop.f32.mrb[0].mxu0
        %v1570 = vadd.f32 %v1275, %v1569
        %v1571 = vpop.f32.mrb[0].mxu0
        %1572 = vmatprep.mubr.f32.mxu0 0.0
        %1573 = vmatmul.mubr.f32.gmra.mrb[0].mxu0 %v1287
        %v1574 = vpop.f32.mrb[0].mxu0
        %v1575 = vadd.f32 %v1275, %v1574
        %v1576 = vpop.f32.mrb[0].mxu0
        %1577 = vmatprep.mubr.f32.mxu0 0.0
        %1578 = vmatmul.mubr.f32.gmra.mrb[0].mxu0 %v1290
        %v1579 = vpop.f32.mrb[0].mxu0
        %v1580 = vadd.f32 %v1275, %v1579
        %v1581 = vpop.f32.mrb[0].mxu0
        %1582 = vmatprep.mubr.f32.mxu0 0.0
        %1583 = vmatmul.mubr.f32.gmra.mrb[0].mxu0 %v1293
        %v1584 = vpop.f32.mrb[0].mxu0
        %v1585 = vadd.f32 %v1275, %v1584
        %v1586 = vpop.f32.mrb[0].mxu0
        %1587 = vmatprep.mubr.f32.mxu0 0.0
        %1588 = vmatmul.mubr.f32.gmra.mrb[0].mxu0 %v1296
        %v1589 = vpop.f32.mrb[0].mxu0
        %v1590 = vadd.f32 %v1275, %v1589
        %v1591 = vpop.f32.mrb[0].mxu0
        %1592 = vmatprep.mubr.f32.mxu0 0.0
        %1593 = vmatmul.mubr.f32.gmra.mrb[0].mxu0 %v1299
        %v1594 = vpop.f32.mrb[0].mxu0
        %v1595 = vadd.f32 %v1275, %v1594
        %v1596 = vpop.f32.mrb[0].mxu0
        %1597 = vmatprep.mubr.f32.mxu0 0.0
        %1598 = vmatmul.mubr.f32.gmra.mrb[0].mxu0 %v1302
        %v1599 = vpop.f32.mrb[0].mxu0
        %v1600 = vadd.f32 %v1275, %v1599
        %v1601 = vpop.f32.mrb[0].mxu0
        %1602 = vmatprep.mubr.f32.mxu0 0.0
        %1603 = vmatmul.mubr.f32.gmra.mrb[0].mxu0 %v1305
        %v1604 = vpop.f32.mrb[0].mxu0
        %v1605 = vadd.f32 %v1275, %v1604
        %v1606 = vpop.f32.mrb[0].mxu0
        %1607 = vmatprep.mubr.f32.mxu0 0.0
        %1608 = vmatmul.mubr.f32.gmra.mrb[0].mxu0 %v1308
        %v1609 = vpop.f32.mrb[0].mxu0
        %v1610 = vadd.f32 %v1275, %v1609
        %v1611 = vpop.f32.mrb[0].mxu0
        %1612 = vmatprep.mubr.f32.mxu0 0.0
        %1613 = vmatmul.mubr.f32.gmra.mrb[0].mxu0 %v1311
        %v1614 = vpop.f32.mrb[0].mxu0
        %v1615 = vadd.f32 %v1275, %v1614
        %v1616 = vpop.f32.mrb[0].mxu0
        %1617 = vmatprep.mubr.f32.mxu0 0.0
        %1618 = vmatmul.mubr.f32.gmra.mrb[0].mxu0 %v1314
        %v1619 = vpop.f32.mrb[0].mxu0
        %v1620 = vadd.f32 %v1275, %v1619
        %v1621 = vpop.f32.mrb[0].mxu0
        %1622 = vmatprep.mubr.f32.mxu0 0.0
        %1623 = vmatmul.mubr.f32.gmra.mrb[0].mxu0 %v1317
        %v1624 = vpop.f32.mrb[0].mxu0
        %v1625 = vadd.f32 %v1275, %v1624
        %v1626 = vpop.f32.mrb[0].mxu0
        %1627 = vmatprep.mubr.f32.mxu0 0.0
        %1628 = vmatmul.mubr.f32.gmra.mrb[0].mxu0 %v1320
        %v1629 = vpop.f32.mrb[0].mxu0
        %v1630 = vadd.f32 %v1275, %v1629
        %v1631 = vpop.f32.mrb[0].mxu0
        %1632 = vmatprep.mubr.f32.mxu0 0.0
        %1633 = vmatmul.mubr.f32.gmra.mrb[0].mxu0 %v1323
        %v1634 = vpop.f32.mrb[0].mxu0
        %v1635 = vadd.f32 %v1275, %v1634
        %v1636 = vpop.f32.mrb[0].mxu0
        %1637 = vmatprep.mubr.f32.mxu0 0.0
        %1638 = vmatmul.mubr.f32.gmra.mrb[0].mxu0 %v1326
        %v1639 = vpop.f32.mrb[0].mxu0
        %v1640 = vadd.f32 %v1275, %v1639
        %v1641 = vpop.f32.mrb[0].mxu0
        %1642 = vmatprep.mubr.f32.mxu0 0.0
        %1643 = vmatmul.mubr.f32.gmra.mrb[0].mxu0 %v1329
        %v1644 = vpop.f32.mrb[0].mxu0
        %v1645 = vadd.f32 %v1275, %v1644
        %v1646 = vpop.f32.mrb[0].mxu0
        %1647 = vmatprep.mubr.f32.mxu0 0.0
        %1648 = vmatmul.mubr.f32.gmra.mrb[0].mxu0 %v1332
        %v1649 = vpop.f32.mrb[0].mxu0
        %v1650 = vadd.f32 %v1275, %v1649
        %v1651 = vpop.f32.mrb[0].mxu0
        %1652 = vmatprep.mubr.f32.mxu0 0.0
        %1653 = vmatmul.mubr.f32.gmra.mrb[0].mxu0 %v1335
        %v1654 = vpop.f32.mrb[0].mxu0
        %v1655 = vadd.f32 %v1275, %v1654
        %v1656 = vpop.f32.mrb[0].mxu0
        %1657 = vmatprep.mubr.f32.mxu0 0.0
        %1658 = vmatmul.mubr.f32.gmra.mrb[0].mxu0 %v1338
        %v1659 = vpop.f32.mrb[0].mxu0
        %v1660 = vadd.f32 %v1275, %v1659
        %v1661 = vpop.f32.mrb[0].mxu0
        %1662 = vmatprep.mubr.f32.mxu0 0.0
        %1663 = vmatmul.mubr.f32.gmra.mrb[0].mxu0 %v1341
        %v1664 = vpop.f32.mrb[0].mxu0
        %v1665 = vadd.f32 %v1275, %v1664
        %v1666 = vpop.f32.mrb[0].mxu0
        %1667 = vmatprep.mubr.f32.mxu0 0.0
        %1668 = vmatmul.mubr.f32.gmra.mrb[0].mxu0 %v1344
        %v1669 = vpop.f32.mrb[0].mxu0
        %v1670 = vadd.f32 %v1275, %v1669
        %v1671 = vpop.f32.mrb[0].mxu0
        %1672 = vmatprep.mubr.f32.mxu0 0.0
        %1673 = vmatmul.mubr.f32.gmra.mrb[0].mxu0 %v1347
        %v1674 = vpop.f32.mrb[0].mxu0
        %v1675 = vadd.f32 %v1275, %v1674
        %v1676 = vpop.f32.mrb[0].mxu0
        %1677 = vmatprep.mubr.f32.mxu0 0.0
        %1678 = vmatmul.mubr.f32.gmra.mrb[0].mxu0 %v1350
        %v1679 = vpop.f32.mrb[0].mxu0
        %v1680 = vadd.f32 %v1275, %v1679
        %v1681 = vpop.f32.mrb[0].mxu0
        %1682 = vmatprep.mubr.f32.mxu0 0.0
        %1683 = vmatmul.mubr.f32.gmra.mrb[0].mxu0 %v1353
        %v1684 = vpop.f32.mrb[0].mxu0
        %v1685 = vadd.f32 %v1275, %v1684
        %v1686 = vpop.f32.mrb[0].mxu0
        %1687 = vmatprep.mubr.f32.mxu0 0.0
        %1688 = vmatmul.mubr.f32.gmra.mrb[0].mxu0 %v1356
        %v1689 = vpop.f32.mrb[0].mxu0
        %v1690 = vadd.f32 %v1275, %v1689
        %v1691 = vpop.f32.mrb[0].mxu0
        %1692 = vmatprep.mubr.f32.mxu0 0.0
        %1693 = vmatmul.mubr.f32.gmra.mrb[0].mxu0 %v1359
        %v1694 = vpop.f32.mrb[0].mxu0
        %v1695 = vadd.f32 %v1275, %v1694
        %v1696 = vpop.f32.mrb[0].mxu0
        %1697 = vmatprep.mubr.f32.mxu0 0.0
        %1698 = vmatmul.mubr.f32.gmra.mrb[0].mxu0 %v1362
        %v1699 = vpop.f32.mrb[0].mxu0
        %v1700 = vadd.f32 %v1275, %v1699
        %v1701 = vpop.f32.mrb[0].mxu0
        %1702 = vmatprep.mubr.f32.mxu0 0.0
        %1703 = vmatmul.mubr.f32.gmra.mrb[0].mxu0 %v1365
        %v1704 = vpop.f32.mrb[0].mxu0
        %v1705 = vadd.f32 %v1275, %v1704
        %v1706 = vpop.f32.mrb[0].mxu0
        %1707 = vmatprep.mubr.f32.mxu0 0.0
        %1708 = vmatmul.mubr.f32.gmra.mrb[0].mxu0 %v1368
        %v1709 = vpop.f32.mrb[0].mxu0
        %v1710 = vadd.f32 %v1275, %v1709
        %v1711 = vpop.f32.mrb[0].mxu0
        %1712 = vmatprep.mubr.f32.mxu0 0.0
        %1713 = vmatmul.mubr.f32.gmra.mrb[0].mxu0 %v1371
        %v1714 = vpop.f32.mrb[0].mxu0
        %v1715 = vadd.f32 %v1275, %v1714
        %v1716 = vpop.f32.mrb[0].mxu0
        %1717 = vmatprep.mubr.f32.mxu0 0.0
        %1718 = vmatmul.mubr.f32.gmra.mrb[0].mxu0 %v1374
        %v1719 = vpop.f32.mrb[0].mxu0
        %v1720 = vadd.f32 %v1275, %v1719
        %v1721 = vpop.f32.mrb[0].mxu0
        %1722 = vmatprep.mubr.f32.mxu0 0.0
        %1723 = vmatmul.mubr.f32.gmra.mrb[0].mxu0 %v1377
        %v1724 = vpop.f32.mrb[0].mxu0
        %v1725 = vadd.f32 %v1275, %v1724
        %v1726 = vpop.f32.mrb[0].mxu0
        %1727 = vmatprep.mubr.f32.mxu0 0.0
        %1728 = vmatmul.mubr.f32.gmra.mrb[0].mxu0 %v1380
        %v1729 = vpop.f32.mrb[0].mxu0
        %v1730 = vadd.f32 %v1275, %v1729
        %v1731 = vpop.f32.mrb[0].mxu0
        %1732 = vmatprep.mubr.f32.mxu0 0.0
        %1733 = vmatmul.mubr.f32.gmra.mrb[0].mxu0 %v1383
        %v1734 = vpop.f32.mrb[0].mxu0
        %v1735 = vadd.f32 %v1275, %v1734
        %v1736 = vpop.f32.mrb[0].mxu0
        %1737 = vmatprep.mubr.f32.mxu0 0.0
        %1738 = vmatmul.mubr.f32.gmra.mrb[0].mxu0 %v1386
        %v1739 = vpop.f32.mrb[0].mxu0
        %v1740 = vadd.f32 %v1275, %v1739
        %v1741 = vpop.f32.mrb[0].mxu0
        %1742 = vmatprep.mubr.f32.mxu0 0.0
        %1743 = vmatmul.mubr.f32.gmra.mrb[0].mxu0 %v1389
        %v1744 = vpop.f32.mrb[0].mxu0
        %v1745 = vadd.f32 %v1275, %v1744
        %v1746 = vpop.f32.mrb[0].mxu0
        %1747 = vmatprep.mubr.f32.mxu0 0.0
        %1748 = vmatmul.mubr.f32.gmra.mrb[0].mxu0 %v1392
        %v1749 = vpop.f32.mrb[0].mxu0
        %v1750 = vadd.f32 %v1275, %v1749
        %v1751 = vpop.f32.mrb[0].mxu0
        %1752 = vmatprep.mubr.f32.mxu0 0.0
        %1753 = vmatmul.mubr.f32.gmra.mrb[0].mxu0 %v1395
        %v1754 = vpop.f32.mrb[0].mxu0
        %v1755 = vadd.f32 %v1275, %v1754
        %v1756 = vpop.f32.mrb[0].mxu0
        %1757 = vmatprep.mubr.f32.mxu0 0.0
        %1758 = vmatmul.mubr.f32.gmra.mrb[0].mxu0 %v1398
        %v1759 = vpop.f32.mrb[0].mxu0
        %v1760 = vadd.f32 %v1275, %v1759
        %v1761 = vpop.f32.mrb[0].mxu0
        %1762 = vmatprep.mubr.f32.mxu0 0.0
        %1763 = vmatmul.mubr.f32.gmra.mrb[0].mxu0 %v1401
        %v1764 = vpop.f32.mrb[0].mxu0
        %v1765 = vadd.f32 %v1275, %v1764
        %v1766 = vpop.f32.mrb[0].mxu0
        %1767 = vmatprep.mubr.f32.mxu0 0.0
        %1768 = vmatmul.mubr.f32.gmra.mrb[0].mxu0 %v1404
        %v1769 = vpop.f32.mrb[0].mxu0
        %v1770 = vadd.f32 %v1275, %v1769
        %v1771 = vpop.f32.mrb[0].mxu0
        %1772 = vmatprep.mubr.f32.mxu0 0.0
        %1773 = vmatmul.mubr.f32.gmra.mrb[0].mxu0 %v1407
        %v1774 = vpop.f32.mrb[0].mxu0
        %v1775 = vadd.f32 %v1275, %v1774
        %v1776 = vpop.f32.mrb[0].mxu0
        %1777 = vmatprep.mubr.f32.mxu0 0.0
        %1778 = vmatmul.mubr.f32.gmra.mrb[0].mxu0 %v1410
        %v1779 = vpop.f32.mrb[0].mxu0
        %v1780 = vadd.f32 %v1275, %v1779
        %v1781 = vpop.f32.mrb[0].mxu0
        %1782 = vmatprep.mubr.f32.mxu0 0.0
        %1783 = vmatmul.mubr.f32.gmra.mrb[0].mxu0 %v1413
        %v1784 = vpop.f32.mrb[0].mxu0
        %v1785 = vadd.f32 %v1275, %v1784
        %v1786 = vpop.f32.mrb[0].mxu0
        %1787 = vmatprep.mubr.f32.mxu0 0.0
        %1788 = vmatmul.mubr.f32.gmra.mrb[0].mxu0 %v1416
        %v1789 = vpop.f32.mrb[0].mxu0
        %v1790 = vadd.f32 %v1275, %v1789
        %v1791 = vpop.f32.mrb[0].mxu0
        %1792 = vmatprep.mubr.f32.mxu0 0.0
        %1793 = vmatmul.mubr.f32.gmra.mrb[0].mxu0 %v1419
        %v1794 = vpop.f32.mrb[0].mxu0
        %v1795 = vadd.f32 %v1275, %v1794
        %v1796 = vpop.f32.mrb[0].mxu0
        %1797 = vmatprep.mubr.f32.mxu0 0.0
        %1798 = vmatmul.mubr.f32.gmra.mrb[0].mxu0 %v1422
        %v1799 = vpop.f32.mrb[0].mxu0
        %v1800 = vadd.f32 %v1275, %v1799
        %v1801 = vpop.f32.mrb[0].mxu0
        %1802 = vmatprep.mubr.f32.mxu0 0.0
        %1803 = vmatmul.mubr.f32.gmra.mrb[0].mxu0 %v1425
        %v1804 = vpop.f32.mrb[0].mxu0
        %v1805 = vadd.f32 %v1275, %v1804
        %v1806 = vpop.f32.mrb[0].mxu0
        %1807 = vmatprep.mubr.f32.mxu0 0.0
        %1808 = vmatmul.mubr.f32.gmra.mrb[0].mxu0 %v1428
        %v1809 = vpop.f32.mrb[0].mxu0
        %v1810 = vadd.f32 %v1275, %v1809
        %v1811 = vpop.f32.mrb[0].mxu0
        %1812 = vmatprep.mubr.f32.mxu0 0.0
        %1813 = vmatmul.mubr.f32.gmra.mrb[0].mxu0 %v1431
        %v1814 = vpop.f32.mrb[0].mxu0
        %v1815 = vadd.f32 %v1275, %v1814
        %v1816 = vpop.f32.mrb[0].mxu0
        %1817 = vmatprep.mubr.f32.mxu0 0.0
        %1818 = vmatmul.mubr.f32.gmra.mrb[0].mxu0 %v1434
        %v1819 = vpop.f32.mrb[0].mxu0
        %v1820 = vadd.f32 %v1275, %v1819
        %v1821 = vpop.f32.mrb[0].mxu0
        %1822 = vmatprep.mubr.f32.mxu0 0.0
        %1823 = vmatmul.mubr.f32.gmra.mrb[0].mxu0 %v1437
        %v1824 = vpop.f32.mrb[0].mxu0
        %v1825 = vadd.f32 %v1275, %v1824
        %v1826 = vpop.f32.mrb[0].mxu0
        %1827 = vmatprep.mubr.f32.mxu0 0.0
        %1828 = vmatmul.mubr.f32.gmra.mrb[0].mxu0 %v1440
        %v1829 = vpop.f32.mrb[0].mxu0
        %v1830 = vadd.f32 %v1275, %v1829
        %v1831 = vpop.f32.mrb[0].mxu0
        %1832 = vmatprep.mubr.f32.mxu0 0.0
        %1833 = vmatmul.mubr.f32.gmra.mrb[0].mxu0 %v1443
        %v1834 = vpop.f32.mrb[0].mxu0
        %v1835 = vadd.f32 %v1275, %v1834
        %v1836 = vpop.f32.mrb[0].mxu0
        %1837 = vmatprep.mubr.f32.mxu0 0.0
        %1838 = vmatmul.mubr.f32.gmra.mrb[0].mxu0 %v1446
        %v1839 = vpop.f32.mrb[0].mxu0
        %v1840 = vadd.f32 %v1275, %v1839
        %v1841 = vpop.f32.mrb[0].mxu0
        %1842 = vmatprep.mubr.f32.mxu0 0.0
        %1843 = vmatmul.mubr.f32.gmra.mrb[0].mxu0 %v1449
        %v1844 = vpop.f32.mrb[0].mxu0
        %v1845 = vadd.f32 %v1275, %v1844
        %v1846 = vpop.f32.mrb[0].mxu0
        %1847 = vmatprep.mubr.f32.mxu0 0.0
        %1848 = vmatmul.mubr.f32.gmra.mrb[0].mxu0 %v1452
        %v1849 = vpop.f32.mrb[0].mxu0
        %v1850 = vadd.f32 %v1275, %v1849
        %v1851 = vpop.f32.mrb[0].mxu0
        %1852 = vmatprep.mubr.f32.mxu0 0.0
        %1853 = vmatmul.mubr.f32.gmra.mrb[0].mxu0 %v1455
        %v1854 = vpop.f32.mrb[0].mxu0
        %v1855 = vadd.f32 %v1275, %v1854
        %v1856 = vpop.f32.mrb[0].mxu0
        %1857 = vmatprep.mubr.f32.mxu0 0.0
        %1858 = vmatmul.mubr.f32.gmra.mrb[0].mxu0 %v1458
        %v1859 = vpop.f32.mrb[0].mxu0
        %v1860 = vadd.f32 %v1275, %v1859
        %v1861 = vpop.f32.mrb[0].mxu0
        %1862 = vmatprep.mubr.f32.mxu0 0.0
        %1863 = vmatmul.mubr.f32.gmra.mrb[0].mxu0 %v1461
        %v1864 = vpop.f32.mrb[0].mxu0
        %v1865 = vadd.f32 %v1275, %v1864
        %v1866 = vpop.f32.mrb[0].mxu0
        %1867 = vmatprep.mubr.f32.mxu0 0.0
        %1868 = vmatmul.mubr.f32.gmra.mrb[0].mxu0 %v1464
        %v1869 = vpop.f32.mrb[0].mxu0
        %v1870 = vadd.f32 %v1275, %v1869
        %v1871 = vpop.f32.mrb[0].mxu0
        %1872 = vmatprep.mubr.f32.mxu0 0.0
        %1873 = vmatmul.mubr.f32.gmra.mrb[0].mxu0 %v1467
        %v1874 = vpop.f32.mrb[0].mxu0
        %v1875 = vadd.f32 %v1275, %v1874
        %v1876 = vpop.f32.mrb[0].mxu0
        %1877 = vmatprep.mubr.f32.mxu0 0.0
        %1878 = vmatmul.mubr.f32.gmra.mrb[0].mxu0 %v1470
        %v1879 = vpop.f32.mrb[0].mxu0
        %v1880 = vadd.f32 %v1275, %v1879
        %v1881 = vpop.f32.mrb[0].mxu0
        %1882 = vmatprep.mubr.f32.mxu0 0.0
        %1883 = vmatmul.mubr.f32.gmra.mrb[0].mxu0 %v1473
        %v1884 = vpop.f32.mrb[0].mxu0
        %v1885 = vadd.f32 %v1275, %v1884
        %v1886 = vpop.f32.mrb[0].mxu0
        %1887 = vmatprep.mubr.f32.mxu0 0.0
        %1888 = vmatmul.mubr.f32.gmra.mrb[0].mxu0 %v1476
        %v1889 = vpop.f32.mrb[0].mxu0
        %v1890 = vadd.f32 %v1275, %v1889
        %v1891 = vpop.f32.mrb[0].mxu0
        %1892 = vmatprep.mubr.f32.mxu0 0.0
        %1893 = vmatmul.mubr.f32.gmra.mrb[0].mxu0 %v1479
        %v1894 = vpop.f32.mrb[0].mxu0
        %v1895 = vadd.f32 %v1275, %v1894
        %v1896 = vpop.f32.mrb[0].mxu0
        %1897 = vmatprep.mubr.f32.mxu0 0.0
        %1898 = vmatmul.mubr.f32.gmra.mrb[0].mxu0 %v1482
        %v1899 = vpop.f32.mrb[0].mxu0
        %v1900 = vadd.f32 %v1275, %v1899
        %v1901 = vpop.f32.mrb[0].mxu0
        %1902 = vmatprep.mubr.f32.mxu0 0.0
        %1903 = vmatmul.mubr.f32.gmra.mrb[0].mxu0 %v1485
        %v1904 = vpop.f32.mrb[0].mxu0
        %v1905 = vadd.f32 %v1275, %v1904
        %v1906 = vpop.f32.mrb[0].mxu0
        %1907 = vmatprep.mubr.f32.mxu0 0.0
        %1908 = vmatmul.mubr.f32.gmra.mrb[0].mxu0 %v1488
        %v1909 = vpop.f32.mrb[0].mxu0
        %v1910 = vadd.f32 %v1275, %v1909
        %v1911 = vpop.f32.mrb[0].mxu0
        %1912 = vmatprep.mubr.f32.mxu0 0.0
        %1913 = vmatmul.mubr.f32.gmra.mrb[0].mxu0 %v1491
        %v1914 = vpop.f32.mrb[0].mxu0
        %v1915 = vadd.f32 %v1275, %v1914
        %v1916 = vpop.f32.mrb[0].mxu0
        %1917 = vdwg.mxu0
        %1919 = vset.pattern.permute.xlu0 0
        %1920 = vperm.xlu0 %1919, %v911
        %v1921 = vpop.permute.xlu0 %1920
        %v1923 = vmul.f32 %v1921, %v1560
        %v1924 = vadd.f32 %v1923, 0.0
        %1925 = vset.pattern.permute.xlu0 1
        %1926 = vperm.xlu0 %1925, %v911
        %v1927 = vpop.permute.xlu0 %1926
        %v1929 = vmul.f32 %v1927, %v1565
        %v1930 = vadd.f32 %v1924, %v1929
        %1931 = vset.pattern.permute.xlu0 2
        %1932 = vperm.xlu0 %1931, %v911
        %v1933 = vpop.permute.xlu0 %1932
        %v1935 = vmul.f32 %v1933, %v1570
        %v1936 = vadd.f32 %v1930, %v1935
        %1937 = vset.pattern.permute.xlu0 3
        %1938 = vperm.xlu0 %1937, %v911
        %v1939 = vpop.permute.xlu0 %1938
        %v1941 = vmul.f32 %v1939, %v1575
        %v1942 = vadd.f32 %v1936, %v1941
        %1943 = vset.pattern.permute.xlu0 4
        %1944 = vperm.xlu0 %1943, %v911
        %v1945 = vpop.permute.xlu0 %1944
        %v1947 = vmul.f32 %v1945, %v1580
        %v1948 = vadd.f32 %v1942, %v1947
        %1949 = vset.pattern.permute.xlu0 5
        %1950 = vperm.xlu0 %1949, %v911
        %v1951 = vpop.permute.xlu0 %1950
        %v1953 = vmul.f32 %v1951, %v1585
        %v1954 = vadd.f32 %v1948, %v1953
        %1955 = vset.pattern.permute.xlu0 6
        %1956 = vperm.xlu0 %1955, %v911
        %v1957 = vpop.permute.xlu0 %1956
        %v1959 = vmul.f32 %v1957, %v1590
        %v1960 = vadd.f32 %v1954, %v1959
        %1961 = vset.pattern.permute.xlu0 7
        %1962 = vperm.xlu0 %1961, %v911
        %v1963 = vpop.permute.xlu0 %1962
        %v1965 = vmul.f32 %v1963, %v1595
        %v1966 = vadd.f32 %v1960, %v1965
        %v1967 = vadd.f32 %v1225, %v1966
        %v1968 = vmax.f32 %v1967, 0.0
        %1970 = vset.pattern.permute.xlu0 0
        %1971 = vperm.xlu0 %1970, %v1032
        %v1972 = vpop.permute.xlu0 %1971
        %1975 = vset.pattern.permute.xlu0 0
        %1976 = vperm.xlu0 %1975, %v1033
        %v1977 = vpop.permute.xlu0 %1976
        %1980 = vset.pattern.permute.xlu0 0
        %1981 = vperm.xlu0 %1980, %v1034
        %v1982 = vpop.permute.xlu0 %1981
        %1985 = vset.pattern.permute.xlu0 0
        %1986 = vperm.xlu0 %1985, %v1035
        %v1987 = vpop.permute.xlu0 %1986
        %1990 = vset.pattern.permute.xlu0 0
        %1991 = vperm.xlu0 %1990, %v1036
        %v1992 = vpop.permute.xlu0 %1991
        %1995 = vset.pattern.permute.xlu0 0
        %1996 = vperm.xlu0 %1995, %v1037
        %v1997 = vpop.permute.xlu0 %1996
        %2000 = vset.pattern.permute.xlu0 0
        %2001 = vperm.xlu0 %2000, %v1038
        %v2002 = vpop.permute.xlu0 %2001
        %2005 = vset.pattern.permute.xlu0 0
        %2006 = vperm.xlu0 %2005, %v1039
        %v2007 = vpop.permute.xlu0 %2006
        %v2009 = vmul.f32 %v1972, %v1600
        %v2010 = vmul.f32 %v1977, %v1605
        %v2011 = vmul.f32 %v1982, %v1610
        %v2012 = vmul.f32 %v1987, %v1615
        %v2013 = vmul.f32 %v1992, %v1620
        %v2014 = vmul.f32 %v1997, %v1625
        %v2015 = vmul.f32 %v2002, %v1630
        %v2016 = vmul.f32 %v2007, %v1635
        %v2017 = vadd.f32 %v2009, 0.0
        %v2018 = vadd.f32 %v2010, 0.0
        %v2019 = vadd.f32 %v2011, 0.0
        %v2020 = vadd.f32 %v2012, 0.0
        %v2021 = vadd.f32 %v2013, 0.0
        %v2022 = vadd.f32 %v2014, 0.0
        %v2023 = vadd.f32 %v2015, 0.0
        %v2024 = vadd.f32 %v2016, 0.0
        %2025 = vset.pattern.permute.xlu0 1
        %2026 = vperm.xlu0 %2025, %v1032
        %v2027 = vpop.permute.xlu0 %2026
        %2029 = vset.pattern.permute.xlu0 1
        %2030 = vperm.xlu0 %2029, %v1033
        %v2031 = vpop.permute.xlu0 %2030
        %2033 = vset.pattern.permute.xlu0 1
        %2034 = vperm.xlu0 %2033, %v1034
        %v2035 = vpop.permute.xlu0 %2034
        %2037 = vset.pattern.permute.xlu0 1
        %2038 = vperm.xlu0 %2037, %v1035
        %v2039 = vpop.permute.xlu0 %2038
        %2041 = vset.pattern.permute.xlu0 1
        %2042 = vperm.xlu0 %2041, %v1036
        %v2043 = vpop.permute.xlu0 %2042
        %2045 = vset.pattern.permute.xlu0 1
        %2046 = vperm.xlu0 %2045, %v1037
        %v2047 = vpop.permute.xlu0 %2046
        %2049 = vset.pattern.permute.xlu0 1
        %2050 = vperm.xlu0 %2049, %v1038
        %v2051 = vpop.permute.xlu0 %2050
        %2053 = vset.pattern.permute.xlu0 1
        %2054 = vperm.xlu0 %2053, %v1039
        %v2055 = vpop.permute.xlu0 %2054
        %v2057 = vmul.f32 %v2027, %v1640
        %v2058 = vmul.f32 %v2031, %v1645
        %v2059 = vmul.f32 %v2035, %v1650
        %v2060 = vmul.f32 %v2039, %v1655
        %v2061 = vmul.f32 %v2043, %v1660
        %v2062 = vmul.f32 %v2047, %v1665
        %v2063 = vmul.f32 %v2051, %v1670
        %v2064 = vmul.f32 %v2055, %v1675
        %v2065 = vadd.f32 %v2017, %v2057
        %v2066 = vadd.f32 %v2018, %v2058
        %v2067 = vadd.f32 %v2019, %v2059
        %v2068 = vadd.f32 %v2020, %v2060
        %v2069 = vadd.f32 %v2021, %v2061
        %v2070 = vadd.f32 %v2022, %v2062
        %v2071 = vadd.f32 %v2023, %v2063
        %v2072 = vadd.f32 %v2024, %v2064
        %2073 = vset.pattern.permute.xlu0 2
        %2074 = vperm.xlu0 %2073, %v1032
        %v2075 = vpop.permute.xlu0 %2074
        %2077 = vset.pattern.permute.xlu0 2
        %2078 = vperm.xlu0 %2077, %v1033
        %v2079 = vpop.permute.xlu0 %2078
        %2081 = vset.pattern.permute.xlu0 2
        %2082 = vperm.xlu0 %2081, %v1034
        %v2083 = vpop.permute.xlu0 %2082
        %2085 = vset.pattern.permute.xlu0 2
        %2086 = vperm.xlu0 %2085, %v1035
        %v2087 = vpop.permute.xlu0 %2086
        %2089 = vset.pattern.permute.xlu0 2
        %2090 = vperm.xlu0 %2089, %v1036
        %v2091 = vpop.permute.xlu0 %2090
        %2093 = vset.pattern.permute.xlu0 2
        %2094 = vperm.xlu0 %2093, %v1037
        %v2095 = vpop.permute.xlu0 %2094
        %2097 = vset.pattern.permute.xlu0 2
        %2098 = vperm.xlu0 %2097, %v1038
        %v2099 = vpop.permute.xlu0 %2098
        %2101 = vset.pattern.permute.xlu0 2
        %2102 = vperm.xlu0 %2101, %v1039
        %v2103 = vpop.permute.xlu0 %2102
        %v2105 = vmul.f32 %v2075, %v1680
        %v2106 = vmul.f32 %v2079, %v1685
        %v2107 = vmul.f32 %v2083, %v1690
        %v2108 = vmul.f32 %v2087, %v1695
        %v2109 = vmul.f32 %v2091, %v1700
        %v2110 = vmul.f32 %v2095, %v1705
        %v2111 = vmul.f32 %v2099, %v1710
        %v2112 = vmul.f32 %v2103, %v1715
        %v2113 = vadd.f32 %v2065, %v2105
        %v2114 = vadd.f32 %v2066, %v2106
        %v2115 = vadd.f32 %v2067, %v2107
        %v2116 = vadd.f32 %v2068, %v2108
        %v2117 = vadd.f32 %v2069, %v2109
        %v2118 = vadd.f32 %v2070, %v2110
        %v2119 = vadd.f32 %v2071, %v2111
        %v2120 = vadd.f32 %v2072, %v2112
        %2121 = vset.pattern.permute.xlu0 3
        %2122 = vperm.xlu0 %2121, %v1032
        %v2123 = vpop.permute.xlu0 %2122
        %2125 = vset.pattern.permute.xlu0 3
        %2126 = vperm.xlu0 %2125, %v1033
        %v2127 = vpop.permute.xlu0 %2126
        %2129 = vset.pattern.permute.xlu0 3
        %2130 = vperm.xlu0 %2129, %v1034
        %v2131 = vpop.permute.xlu0 %2130
        %2133 = vset.pattern.permute.xlu0 3
        %2134 = vperm.xlu0 %2133, %v1035
        %v2135 = vpop.permute.xlu0 %2134
        %2137 = vset.pattern.permute.xlu0 3
        %2138 = vperm.xlu0 %2137, %v1036
        %v2139 = vpop.permute.xlu0 %2138
        %2141 = vset.pattern.permute.xlu0 3
        %2142 = vperm.xlu0 %2141, %v1037
        %v2143 = vpop.permute.xlu0 %2142
        %2145 = vset.pattern.permute.xlu0 3
        %2146 = vperm.xlu0 %2145, %v1038
        %v2147 = vpop.permute.xlu0 %2146
        %2149 = vset.pattern.permute.xlu0 3
        %2150 = vperm.xlu0 %2149, %v1039
        %v2151 = vpop.permute.xlu0 %2150
        %v2153 = vmul.f32 %v2123, %v1720
        %v2154 = vmul.f32 %v2127, %v1725
        %v2155 = vmul.f32 %v2131, %v1730
        %v2156 = vmul.f32 %v2135, %v1735
        %v2157 = vmul.f32 %v2139, %v1740
        %v2158 = vmul.f32 %v2143, %v1745
        %v2159 = vmul.f32 %v2147, %v1750
        %v2160 = vmul.f32 %v2151, %v1755
        %v2161 = vadd.f32 %v2113, %v2153
        %v2162 = vadd.f32 %v2114, %v2154
        %v2163 = vadd.f32 %v2115, %v2155
        %v2164 = vadd.f32 %v2116, %v2156
        %v2165 = vadd.f32 %v2117, %v2157
        %v2166 = vadd.f32 %v2118, %v2158
        %v2167 = vadd.f32 %v2119, %v2159
        %v2168 = vadd.f32 %v2120, %v2160
        %2169 = vset.pattern.permute.xlu0 4
        %2170 = vperm.xlu0 %2169, %v1032
        %v2171 = vpop.permute.xlu0 %2170
        %2173 = vset.pattern.permute.xlu0 4
        %2174 = vperm.xlu0 %2173, %v1033
        %v2175 = vpop.permute.xlu0 %2174
        %2177 = vset.pattern.permute.xlu0 4
        %2178 = vperm.xlu0 %2177, %v1034
        %v2179 = vpop.permute.xlu0 %2178
        %2181 = vset.pattern.permute.xlu0 4
        %2182 = vperm.xlu0 %2181, %v1035
        %v2183 = vpop.permute.xlu0 %2182
        %2185 = vset.pattern.permute.xlu0 4
        %2186 = vperm.xlu0 %2185, %v1036
        %v2187 = vpop.permute.xlu0 %2186
        %2189 = vset.pattern.permute.xlu0 4
        %2190 = vperm.xlu0 %2189, %v1037
        %v2191 = vpop.permute.xlu0 %2190
        %2193 = vset.pattern.permute.xlu0 4
        %2194 = vperm.xlu0 %2193, %v1038
        %v2195 = vpop.permute.xlu0 %2194
        %2197 = vset.pattern.permute.xlu0 4
        %2198 = vperm.xlu0 %2197, %v1039
        %v2199 = vpop.permute.xlu0 %2198
        %v2201 = vmul.f32 %v2171, %v1760
        %v2202 = vmul.f32 %v2175, %v1765
        %v2203 = vmul.f32 %v2179, %v1770
        %v2204 = vmul.f32 %v2183, %v1775
        %v2205 = vmul.f32 %v2187, %v1780
        %v2206 = vmul.f32 %v2191, %v1785
        %v2207 = vmul.f32 %v2195, %v1790
        %v2208 = vmul.f32 %v2199, %v1795
        %v2209 = vadd.f32 %v2161, %v2201
        %v2210 = vadd.f32 %v2162, %v2202
        %v2211 = vadd.f32 %v2163, %v2203
        %v2212 = vadd.f32 %v2164, %v2204
        %v2213 = vadd.f32 %v2165, %v2205
        %v2214 = vadd.f32 %v2166, %v2206
        %v2215 = vadd.f32 %v2167, %v2207
        %v2216 = vadd.f32 %v2168, %v2208
        %2217 = vset.pattern.permute.xlu0 5
        %2218 = vperm.xlu0 %2217, %v1032
        %v2219 = vpop.permute.xlu0 %2218
        %2221 = vset.pattern.permute.xlu0 5
        %2222 = vperm.xlu0 %2221, %v1033
        %v2223 = vpop.permute.xlu0 %2222
        %2225 = vset.pattern.permute.xlu0 5
        %2226 = vperm.xlu0 %2225, %v1034
        %v2227 = vpop.permute.xlu0 %2226
        %2229 = vset.pattern.permute.xlu0 5
        %2230 = vperm.xlu0 %2229, %v1035
        %v2231 = vpop.permute.xlu0 %2230
        %2233 = vset.pattern.permute.xlu0 5
        %2234 = vperm.xlu0 %2233, %v1036
        %v2235 = vpop.permute.xlu0 %2234
        %2237 = vset.pattern.permute.xlu0 5
        %2238 = vperm.xlu0 %2237, %v1037
        %v2239 = vpop.permute.xlu0 %2238
        %2241 = vset.pattern.permute.xlu0 5
        %2242 = vperm.xlu0 %2241, %v1038
        %v2243 = vpop.permute.xlu0 %2242
        %2245 = vset.pattern.permute.xlu0 5
        %2246 = vperm.xlu0 %2245, %v1039
        %v2247 = vpop.permute.xlu0 %2246
        %v2249 = vmul.f32 %v2219, %v1800
        %v2250 = vmul.f32 %v2223, %v1805
        %v2251 = vmul.f32 %v2227, %v1810
        %v2252 = vmul.f32 %v2231, %v1815
        %v2253 = vmul.f32 %v2235, %v1820
        %v2254 = vmul.f32 %v2239, %v1825
        %v2255 = vmul.f32 %v2243, %v1830
        %v2256 = vmul.f32 %v2247, %v1835
        %v2257 = vadd.f32 %v2209, %v2249
        %v2258 = vadd.f32 %v2210, %v2250
        %v2259 = vadd.f32 %v2211, %v2251
        %v2260 = vadd.f32 %v2212, %v2252
        %v2261 = vadd.f32 %v2213, %v2253
        %v2262 = vadd.f32 %v2214, %v2254
        %v2263 = vadd.f32 %v2215, %v2255
        %v2264 = vadd.f32 %v2216, %v2256
        %2265 = vset.pattern.permute.xlu0 6
        %2266 = vperm.xlu0 %2265, %v1032
        %v2267 = vpop.permute.xlu0 %2266
        %2269 = vset.pattern.permute.xlu0 6
        %2270 = vperm.xlu0 %2269, %v1033
        %v2271 = vpop.permute.xlu0 %2270
        %2273 = vset.pattern.permute.xlu0 6
        %2274 = vperm.xlu0 %2273, %v1034
        %v2275 = vpop.permute.xlu0 %2274
        %2277 = vset.pattern.permute.xlu0 6
        %2278 = vperm.xlu0 %2277, %v1035
        %v2279 = vpop.permute.xlu0 %2278
        %2281 = vset.pattern.permute.xlu0 6
        %2282 = vperm.xlu0 %2281, %v1036
        %v2283 = vpop.permute.xlu0 %2282
        %2285 = vset.pattern.permute.xlu0 6
        %2286 = vperm.xlu0 %2285, %v1037
        %v2287 = vpop.permute.xlu0 %2286
        %2289 = vset.pattern.permute.xlu0 6
        %2290 = vperm.xlu0 %2289, %v1038
        %v2291 = vpop.permute.xlu0 %2290
        %2293 = vset.pattern.permute.xlu0 6
        %2294 = vperm.xlu0 %2293, %v1039
        %v2295 = vpop.permute.xlu0 %2294
        %v2297 = vmul.f32 %v2267, %v1840
        %v2298 = vmul.f32 %v2271, %v1845
        %v2299 = vmul.f32 %v2275, %v1850
        %v2300 = vmul.f32 %v2279, %v1855
        %v2301 = vmul.f32 %v2283, %v1860
        %v2302 = vmul.f32 %v2287, %v1865
        %v2303 = vmul.f32 %v2291, %v1870
        %v2304 = vmul.f32 %v2295, %v1875
        %v2305 = vadd.f32 %v2257, %v2297
        %v2306 = vadd.f32 %v2258, %v2298
        %v2307 = vadd.f32 %v2259, %v2299
        %v2308 = vadd.f32 %v2260, %v2300
        %v2309 = vadd.f32 %v2261, %v2301
        %v2310 = vadd.f32 %v2262, %v2302
        %v2311 = vadd.f32 %v2263, %v2303
        %v2312 = vadd.f32 %v2264, %v2304
        %2313 = vset.pattern.permute.xlu0 7
        %2314 = vperm.xlu0 %2313, %v1032
        %v2315 = vpop.permute.xlu0 %2314
        %2317 = vset.pattern.permute.xlu0 7
        %2318 = vperm.xlu0 %2317, %v1033
        %v2319 = vpop.permute.xlu0 %2318
        %2321 = vset.pattern.permute.xlu0 7
        %2322 = vperm.xlu0 %2321, %v1034
        %v2323 = vpop.permute.xlu0 %2322
        %2325 = vset.pattern.permute.xlu0 7
        %2326 = vperm.xlu0 %2325, %v1035
        %v2327 = vpop.permute.xlu0 %2326
        %2329 = vset.pattern.permute.xlu0 7
        %2330 = vperm.xlu0 %2329, %v1036
        %v2331 = vpop.permute.xlu0 %2330
        %2333 = vset.pattern.permute.xlu0 7
        %2334 = vperm.xlu0 %2333, %v1037
        %v2335 = vpop.permute.xlu0 %2334
        %2337 = vset.pattern.permute.xlu0 7
        %2338 = vperm.xlu0 %2337, %v1038
        %v2339 = vpop.permute.xlu0 %2338
        %2341 = vset.pattern.permute.xlu0 7
        %2342 = vperm.xlu0 %2341, %v1039
        %v2343 = vpop.permute.xlu0 %2342
        %v2345 = vmul.f32 %v2315, %v1880
        %v2346 = vmul.f32 %v2319, %v1885
        %v2347 = vmul.f32 %v2323, %v1890
        %v2348 = vmul.f32 %v2327, %v1895
        %v2349 = vmul.f32 %v2331, %v1900
        %v2350 = vmul.f32 %v2335, %v1905
        %v2351 = vmul.f32 %v2339, %v1910
        %v2352 = vmul.f32 %v2343, %v1915
        %v2353 = vadd.f32 %v2305, %v2345
        %v2354 = vadd.f32 %v2306, %v2346
        %v2355 = vadd.f32 %v2307, %v2347
        %v2356 = vadd.f32 %v2308, %v2348
        %v2357 = vadd.f32 %v2309, %v2349
        %v2358 = vadd.f32 %v2310, %v2350
        %v2359 = vadd.f32 %v2311, %v2351
        %v2360 = vadd.f32 %v2312, %v2352
        %v2361 = vadd.f32 %v1230, %v2353
        %v2362 = vadd.f32 %v1235, %v2354
        %v2363 = vadd.f32 %v1240, %v2355
        %v2364 = vadd.f32 %v1245, %v2356
        %v2365 = vadd.f32 %v1250, %v2357
        %v2366 = vadd.f32 %v1255, %v2358
        %v2367 = vadd.f32 %v1260, %v2359
        %v2368 = vadd.f32 %v1265, %v2360
        %v2369 = vmax.f32 %v2361, 0.0
        %v2370 = vmax.f32 %v2362, 0.0
        %v2371 = vmax.f32 %v2363, 0.0
        %v2372 = vmax.f32 %v2364, 0.0
        %v2373 = vmax.f32 %v2365, 0.0
        %v2374 = vmax.f32 %v2366, 0.0
        %v2375 = vmax.f32 %v2367, 0.0
        %v2376 = vmax.f32 %v2368, 0.0
        %v2377 = vmul.f32 %v1921, %v2369
        %v2378 = vadd.f32 %v2377, 0.0
        %v2379 = vmul.f32 %v1927, %v2370
        %v2380 = vadd.f32 %v2378, %v2379
        %v2381 = vmul.f32 %v1933, %v2371
        %v2382 = vadd.f32 %v2380, %v2381
        %v2383 = vmul.f32 %v1939, %v2372
        %v2384 = vadd.f32 %v2382, %v2383
        %v2385 = vmul.f32 %v1945, %v2373
        %v2386 = vadd.f32 %v2384, %v2385
        %v2387 = vmul.f32 %v1951, %v2374
        %v2388 = vadd.f32 %v2386, %v2387
        %v2389 = vmul.f32 %v1957, %v2375
        %v2390 = vadd.f32 %v2388, %v2389
        %v2391 = vmul.f32 %v1963, %v2376
        %v2392 = vadd.f32 %v2390, %v2391
        %2394 = vrot.lane.b32.xlu0 %v2392, 32
        %v2395 = vpop.permute.xlu0 %2394
        %vm2397 = vcmask 261120
        %v2398 = vsel %vm2397, %v1968, %v2395
        %v2399 = vld [vmem:[%s8] sm:$0xff]
        %v2400 = vld [vmem:[%s8 + $0x8] sm:$0xff]
        %v2401 = vld [vmem:[%s8 + $0x10] sm:$0xff]
        %v2402 = vld [vmem:[%s8 + $0x18] sm:$0xff]
        %v2403 = vld [vmem:[%s8 + $0x20] sm:$0xff]
        %v2404 = vld [vmem:[%s8 + $0x28] sm:$0xff]
        %v2405 = vld [vmem:[%s8 + $0x30] sm:$0xff]
        %v2406 = vld [vmem:[%s8 + $0x38] sm:$0xff]
        %v2407 = vld [vmem:[%s9] sm:$0x1]
        %v2409 = vlaneseq
        %v2410 = vshrl.u32 %v2409, 7
        %v2411 = vsub.s32 0, %v2410
        %v2412 = vrot.slane %v2407, %v2411
        %vm2414 = vcmask 523264
        %v2416 = vsel %vm2414, %v2398, 0
        %2418 = vmatprep.subr.mxu0 0.0
        %2419 = vmatpush1.msra.mxu0 %v2399
        %2420 = vmatprep.subr.mxu0 0.0
        %2421 = vmatpush1.msra.mxu0 %v2400
        %2422 = vmatprep.subr.mxu0 0.0
        %2423 = vmatpush1.msra.mxu0 %v2401
        %2424 = vmatprep.subr.mxu0 0.0
        %2425 = vmatpush1.msra.mxu0 %v2402
        %2426 = vmatprep.subr.mxu0 0.0
        %2427 = vmatpush1.msra.mxu0 %v2403
        %2428 = vmatprep.subr.mxu0 0.0
        %2429 = vmatpush1.msra.mxu0 %v2404
        %2430 = vmatprep.subr.mxu0 0.0
        %2431 = vmatpush1.msra.mxu0 %v2405
        %2432 = vmatprep.subr.mxu0 0.0
        %2433 = vmatpush1.msra.mxu0 %v2406
        %2434 = vmatprep.subr.mxu0 0.0
        %2435 = vmatpush1.msra.mxu0 0.0
        %2436 = vmatprep.subr.mxu0 0.0
        %2437 = vmatpush1.msra.mxu0 0.0
        %2438 = vmatprep.subr.mxu0 0.0
        %2439 = vmatpush1.msra.mxu0 0.0
        %2440 = vmatprep.subr.mxu0 0.0
        %2441 = vmatpush1.msra.mxu0 0.0
        %2442 = vmatprep.subr.mxu0 0.0
        %2443 = vmatpush1.msra.mxu0 0.0
        %2444 = vmatprep.subr.mxu0 0.0
        %2445 = vmatpush1.msra.mxu0 0.0
        %2446 = vmatprep.subr.mxu0 0.0
        %2447 = vmatpush1.msra.mxu0 0.0
        %2448 = vmatprep.subr.mxu0 0.0
        %2449 = vmatpush1.msra.mxu0 0.0
        %2450 = vmatprep.subr.mxu0 0.0
        %2451 = vmatpush1.msra.mxu0 0.0
        %2452 = vmatprep.subr.mxu0 0.0
        %2453 = vmatpush1.msra.mxu0 0.0
        %2454 = vmatprep.subr.mxu0 0.0
        %2455 = vmatpush1.msra.mxu0 0.0
        %2456 = vmatprep.subr.mxu0 0.0
        %2457 = vmatpush1.msra.mxu0 0.0
        %2458 = vmatprep.subr.mxu0 0.0
        %2459 = vmatpush1.msra.mxu0 0.0
        %2460 = vmatprep.subr.mxu0 0.0
        %2461 = vmatpush1.msra.mxu0 0.0
        %2462 = vmatprep.subr.mxu0 0.0
        %2463 = vmatpush1.msra.mxu0 0.0
        %2464 = vmatprep.subr.mxu0 0.0
        %2465 = vmatpush1.msra.mxu0 0.0
        %2466 = vmatprep.subr.mxu0 0.0
        %2467 = vmatpush1.msra.mxu0 0.0
        %2468 = vmatprep.subr.mxu0 0.0
        %2469 = vmatpush1.msra.mxu0 0.0
        %2470 = vmatprep.subr.mxu0 0.0
        %2471 = vmatpush1.msra.mxu0 0.0
        %2472 = vmatprep.subr.mxu0 0.0
        %2473 = vmatpush1.msra.mxu0 0.0
        %2474 = vmatprep.subr.mxu0 0.0
        %2475 = vmatpush1.msra.mxu0 0.0
        %2476 = vmatprep.subr.mxu0 0.0
        %2477 = vmatpush1.msra.mxu0 0.0
        %2478 = vmatprep.subr.mxu0 0.0
        %2479 = vmatpush1.msra.mxu0 0.0
        %2480 = vmatprep.subr.mxu0 0.0
        %2481 = vmatpush1.msra.mxu0 0.0
        %2482 = vmatprep.mubr.f32.mxu0 0.0
        %2483 = vmatmul.mubr.f32.gmra.mrb[0].mxu0 %v2416
        %v2484 = vpop.f32.mrb[0].mxu0
        %v2485 = vadd.f32 %v2412, %v2484
        %v2486 = vpop.f32.mrb[0].mxu0
        %2487 = vdwg.mxu0
        %2488 = vst [vmem:[%s883] sm:$0xff] %v2485
        %s2489 = sand.u32 %s284, 1
        %s2490 = scalar_lea.sflag [#allocation6], %s2489
        %s2491 = sand.u32 %s284, 1
        %s2492 = smul.addr %s2491, 8
        %s2493 = scalar_lea.vmem [#allocation5], %s2492
        // Predicated region
        $region179: #{tpu_custom_call.1} parent=165 // pred_check
          %p2494 = pneg %p294
        $region180: #{tpu_custom_call.1} parent=165 // pred_check_branch
          %2496 = sbr.rel (%p2494) target = $region182
        $region181: #{tpu_custom_call.1} parent=165 // pred_region
          %s2498 = ssub.s32 128, 128
          %2499 = vsyncadd %s2490, %s2498
          %s2500 = smul.addr %s25, 128
          %s2501 = scalar_lea.hbm %s11, %s2500
          %s2503 = sshll.u32 %s2493, 4
          %s2504 = int_to_ptr.vmem [resolvable:$true] %s2503
          %2506 = dma.vmem_to_hbm [thread:$0]  %s2504, 128, %s2501, %s2490
        $region182: #{tpu_custom_call.1} parent=165 // pred_fallthru
          _
      $region166: #{tpu_custom_call.1} parent=5 // pred_fallthru
        _
      %p2507 = scmp.le.s32.totalorder 2, %s20
      // Predicated region
      $region183: #{tpu_custom_call.1} parent=5 // pred_check
        %p2508 = pneg %p2507
      $region184: #{tpu_custom_call.1} parent=5 // pred_check_branch
        %2510 = sbr.rel (%p2508) target = $region186
      $region185: #{tpu_custom_call.1} parent=5 // pred_region
        %s2511 = ssub.s32 %s20, 2
        // Predicated region
        $region187: #{tpu_custom_call.1} parent=185 // pred_check
          %p2512 = pneg %p300
        $region188: #{tpu_custom_call.1} parent=185 // pred_check_branch
          %2514 = sbr.rel (%p2512) target = $region190
        $region189: #{tpu_custom_call.1} parent=185 // pred_region
          %s2515 = sand.u32 %s285, 1
          %s2516 = scalar_lea.sflag [#allocation6], %s2515
          %s2517 = sand.u32 %s285, 1
          %s2518 = smul.addr %s2517, 8
          %s2519 = scalar_lea.vmem [#allocation5], %s2518
          %2520 = dma.done %s2516, 128
        $region190: #{tpu_custom_call.1} parent=185 // pred_fallthru
          _
      $region186: #{tpu_custom_call.1} parent=5 // pred_fallthru
        _
    $region6: #{tpu_custom_call.1} parent=1 // loop_footer
      %s24 = sadd.s32 1, %s20
    $region7: #{tpu_custom_call.1} parent=1 // loop_footer_branch
      %19 = sbr.rel target = $region3
    $region8: #{tpu_custom_call.1} parent=1 // loop_exit
      _
    %2521 = vsyncpa [#allocation6], 1
    %s2522 = scalar_lea.sflag [#allocation6], 1
    %2523 = vsyncpa %s2522, 1

</llo_original>
